<compile_context>
chip_gen: v7x
topology: tpu7x:2x2x1
jax: 0.10.0
libtpu: 0.0.40
codegen_flags: <defaults>
</compile_context>

<pallas_src>
import functools

import jax
import jax.numpy as jnp
from jax.experimental import pallas as pl
from jax.experimental.pallas import tpu as pltpu

H = 64          # LSTM hidden size (module default)
G = 4 * H       # i, f, g, o gates stacked in PyTorch order
N1 = 16         # head hidden size (Linear 64 -> 16 -> 1)

# Row offsets inside the packed head buffer (all multiples of 8 sublanes).
_WL1_ROW = 0
_BL1_ROW = H                 # 64
_WL2_ROW = 72                # round_up(H + 1, 8)
_BL2_ROW = _WL2_ROW + N1     # 88
_HEAD_ROWS = 96              # round_up(_BL2_ROW + 1, 8)


def lstm_kernel(x_ref, lw_ref, hw_ref, out_ref, *, L, B, D_PAD):
    """x_ref : (L*B, D_PAD) time-major inputs; column D holds the constant 1.0
       lw_ref: (D_PAD + H, 4H) packed [W_ih^T ; b_ih+b_hh ; 0-pad ; W_hh^T]
       hw_ref: (_HEAD_ROWS, N1) packed [W_l1^T ; b_l1 ; W_l2^T ; b_l2]
       out_ref: (B, 1) sigmoid output."""
    # ---- all timestep input projections + bias in ONE MXU matmul -----------
    wih = lw_ref[0:D_PAD, :]                         # (D_PAD, 4H), bias row folded in
    whh = lw_ref[D_PAD:D_PAD + H, :]                 # (H, 4H)
    xp = jnp.dot(x_ref[...], wih,
                 preferred_element_type=jnp.float32)  # (L*B, 4H)

    # ---- recurrence (inherently serial over time; batch on the M dim) ------
    h = jnp.zeros((B, H), jnp.float32)               # h0 = 0
    c = jnp.zeros((B, H), jnp.float32)               # c0 = 0
    for t in range(L):                               # static unroll, small L
        z = xp[t * B:(t + 1) * B, :] + jnp.dot(
            h, whh, preferred_element_type=jnp.float32)          # (B, 4H)
        i = jax.nn.sigmoid(z[:, 0:H])
        f = jax.nn.sigmoid(z[:, H:2 * H])
        g = jnp.tanh(z[:, 2 * H:3 * H])
        o = jax.nn.sigmoid(z[:, 3 * H:4 * H])
        c = f * c + i * g
        h = o * jnp.tanh(c)                          # after last t: h == lstm_out[-1]

    # ---- MLP head: dropout(identity) -> 64->16 -> ReLU -> 16->1 -> sigmoid --
    # TODO(synk): training-mode dropout (p=0.25) is not implemented; eval identity.
    wl1 = hw_ref[_WL1_ROW:_WL1_ROW + H, :]           # (64, 16)  pre-transposed
    bl1 = hw_ref[_BL1_ROW:_BL1_ROW + 1, :]           # (1, 16)
    wl2 = hw_ref[_WL2_ROW:_WL2_ROW + N1, 0:1]        # (16, 1)   pre-transposed
    bl2 = hw_ref[_BL2_ROW:_BL2_ROW + 1, 0:1]         # (1, 1)

    y = jnp.dot(h, wl1, preferred_element_type=jnp.float32) + bl1
    y = jnp.maximum(y, 0.0)
    y = jnp.dot(y, wl2, preferred_element_type=jnp.float32) + bl2
    out_ref[...] = jax.nn.sigmoid(y)                 # (B, 1), single store


def lstm_forward(x, params):
    """Eval-mode forward of the PyTorch `LSTM` module as one Pallas call."""
    if x.ndim == 2:                  # mirror torch unsqueeze(dim=1): (B, L) -> (B, 1, L)
        x = x[:, None, :]
    x = x.astype(jnp.float32)
    B, D, L = x.shape
    D_PAD = ((D + 1 + 7) // 8) * 8   # room for the constant-1 bias column, 8-aligned

    # ---- host-side layout plumbing (free): permute + augment x -------------
    xs = jnp.transpose(x, (2, 0, 1)).reshape(L * B, D)     # time-major (L*B, D)
    x_aug = jnp.zeros((L * B, D_PAD), jnp.float32)
    x_aug = x_aug.at[:, :D].set(xs)
    x_aug = x_aug.at[:, D].set(1.0)                        # bias column

    # ---- pack LSTM weights: [W_ih^T ; b_ih+b_hh ; 0 ; W_hh^T] ---------------
    lstm_w = jnp.zeros((D_PAD + H, G), jnp.float32)
    lstm_w = lstm_w.at[:D, :].set(params["w_ih"].T)
    lstm_w = lstm_w.at[D, :].set(params["b_ih"] + params["b_hh"])
    lstm_w = lstm_w.at[D_PAD:, :].set(params["w_hh"].T)

    # ---- pack head weights (pre-transposed) ---------------------------------
    head_w = jnp.zeros((_HEAD_ROWS, N1), jnp.float32)
    head_w = head_w.at[_WL1_ROW:_WL1_ROW + H, :].set(params["wl1"].T)
    head_w = head_w.at[_BL1_ROW, :].set(params["bl1"])
    head_w = head_w.at[_WL2_ROW:_WL2_ROW + N1, 0].set(params["wl2"][0])
    head_w = head_w.at[_BL2_ROW, 0].set(params["bl2"][0])

    kernel = functools.partial(lstm_kernel, L=L, B=B, D_PAD=D_PAD)
    vmem = lambda: pl.BlockSpec(memory_space=pltpu.MemorySpace.VMEM)
    return pl.pallas_call(
        kernel,
        out_shape=jax.ShapeDtypeStruct((B, 1), jnp.float32),
        in_specs=[vmem(), vmem(), vmem()],
        out_specs=vmem(),
    )(x_aug, lstm_w, head_w)


# ----- plain-JAX reference (independent path, PyTorch param layout) ----------
def lstm_ref(x, p):
    if x.ndim == 2:
        x = x[:, None, :]
    x = x.astype(jnp.float32)
    xs = jnp.transpose(x, (2, 0, 1))                 # (L, B, D)
    B = xs.shape[1]
    h0 = jnp.zeros((B, H), jnp.float32)
    c0 = jnp.zeros((B, H), jnp.float32)
    w_ih, w_hh = p["w_ih"], p["w_hh"]
    b = p["b_ih"] + p["b_hh"]

    def step(carry, xt):
        h, c = carry
        z = xt @ w_ih.T + h @ w_hh.T + b
        i = jax.nn.sigmoid(z[:, 0:H])
        f = jax.nn.sigmoid(z[:, H:2 * H])
        g = jnp.tanh(z[:, 2 * H:3 * H])
        o = jax.nn.sigmoid(z[:, 3 * H:4 * H])
        c = f * c + i * g
        h = o * jnp.tanh(c)
        return (h, c), None

    (h, _), _ = jax.lax.scan(step, (h0, c0), xs)
    y = jnp.maximum(h @ p["wl1"].T + p["bl1"], 0.0)
    y = y @ p["wl2"].T + p["bl2"]
    return jax.nn.sigmoid(y)


def init_params(key, input_dim):
    """PyTorch-layout parameters with PyTorch-style uniform init."""
    ks = jax.random.split(key, 8)

    def u(k, shape, bound):
        return jax.random.uniform(k, shape, jnp.float32, -bound, bound)

    kl = 1.0 / H ** 0.5
    return dict(
        w_ih=u(ks[0], (G, input_dim), kl),   # weight_ih_l0 (4H, D), gates [i,f,g,o]
        w_hh=u(ks[1], (G, H), kl),           # weight_hh_l0 (4H, H)
        b_ih=u(ks[2], (G,), kl),
        b_hh=u(ks[3], (G,), kl),
        wl1=u(ks[4], (N1, H), 1.0 / H ** 0.5),   # Linear1 (16, 64)
        bl1=u(ks[5], (N1,), 1.0 / H ** 0.5),
        wl2=u(ks[6], (1, N1), 1.0 / N1 ** 0.5),  # Linear2 (1, 16)
        bl2=u(ks[7], (1,), 1.0 / N1 ** 0.5),
    )


if __name__ == "__main__":
    B, INPUT_DIM, SEQ_LEN = 2, 4, 16
    key = jax.random.PRNGKey(0)
    kx, kp = jax.random.split(key)
    x = jax.random.normal(kx, (B, INPUT_DIM, SEQ_LEN), jnp.float32)
    params = init_params(kp, INPUT_DIM)

    out = lstm_forward(x, params)
    out = jax.block_until_ready(out)

    ref = lstm_ref(x, params)
    assert out.shape == (B, 1), out.shape
    assert jnp.allclose(out, ref, rtol=1e-4, atol=1e-4), (out, ref)
    print("KERNEL_OK")
</pallas_src>

<mosaic_0001>
module attributes {stable_mosaic.version = 11 : i64} {
  func.func @lstm_kernel(%arg0: memref<32x8xf32, #tpu.memory_space<vmem>>, %arg1: memref<72x256xf32, #tpu.memory_space<vmem>>, %arg2: memref<96x16xf32, #tpu.memory_space<vmem>>, %arg3: memref<2x1xf32, #tpu.memory_space<vmem>>) attributes {dimension_semantics = [], scalar_prefetch = 0 : i64, scratch_operands = 0 : i64, tpu.core_type = #tpu.core_type<tc>} {
    %c0 = arith.constant 0 : index
    %c0_0 = arith.constant 0 : index
    %0 = vector.load %arg1[%c0, %c0_0] : memref<72x256xf32, #tpu.memory_space<vmem>>, vector<8x256xf32>
    %c8 = arith.constant 8 : index
    %c0_1 = arith.constant 0 : index
    %1 = vector.load %arg1[%c8, %c0_1] : memref<72x256xf32, #tpu.memory_space<vmem>>, vector<64x256xf32>
    %c0_2 = arith.constant 0 : index
    %c0_3 = arith.constant 0 : index
    %2 = vector.load %arg0[%c0_2, %c0_3] : memref<32x8xf32, #tpu.memory_space<vmem>>, vector<32x8xf32>
    %cst = arith.constant dense<0.000000e+00> : vector<32x256xf32>
    %3 = tpu.matmul %2, %0, %cst {dimension_numbers = #tpu.dot_dimension_numbers<[1], [0], [0], [1], [0, 0, 1, 1], [], []>} : vector<32x8xf32>, vector<8x256xf32>, vector<32x256xf32> -> vector<32x256xf32>
    %cst_4 = arith.constant 0.000000e+00 : f32
    %4 = vector.broadcast %cst_4 : f32 to vector<2x64xf32>
    %cst_5 = arith.constant 0.000000e+00 : f32
    %5 = vector.broadcast %cst_5 : f32 to vector<2x64xf32>
    %6 = vector.extract_strided_slice %3 {offsets = [0, 0], sizes = [2, 256], strides = [1, 1]} : vector<32x256xf32> to vector<2x256xf32>
    %cst_6 = arith.constant dense<0.000000e+00> : vector<2x256xf32>
    %7 = tpu.matmul %4, %1, %cst_6 {dimension_numbers = #tpu.dot_dimension_numbers<[1], [0], [0], [1], [0, 0, 1, 1], [], []>} : vector<2x64xf32>, vector<64x256xf32>, vector<2x256xf32> -> vector<2x256xf32>
    %8 = arith.addf %6, %7 : vector<2x256xf32>
    %9 = vector.extract_strided_slice %8 {offsets = [0, 0], sizes = [2, 64], strides = [1, 1]} : vector<2x256xf32> to vector<2x64xf32>
    %10 = arith.negf %9 : vector<2x64xf32>
    %11 = math.exp %10 : vector<2x64xf32>
    %cst_7 = arith.constant 1.000000e+00 : f32
    %12 = vector.broadcast %cst_7 : f32 to vector<2x64xf32>
    %13 = arith.addf %12, %11 : vector<2x64xf32>
    %14 = arith.divf %12, %13 : vector<2x64xf32>
    %15 = vector.extract_strided_slice %8 {offsets = [0, 64], sizes = [2, 64], strides = [1, 1]} : vector<2x256xf32> to vector<2x64xf32>
    %16 = arith.negf %15 : vector<2x64xf32>
    %17 = math.exp %16 : vector<2x64xf32>
    %cst_8 = arith.constant 1.000000e+00 : f32
    %18 = vector.broadcast %cst_8 : f32 to vector<2x64xf32>
    %19 = arith.addf %18, %17 : vector<2x64xf32>
    %20 = arith.divf %18, %19 : vector<2x64xf32>
    %21 = vector.extract_strided_slice %8 {offsets = [0, 128], sizes = [2, 64], strides = [1, 1]} : vector<2x256xf32> to vector<2x64xf32>
    %22 = math.tanh %21 : vector<2x64xf32>
    %23 = vector.extract_strided_slice %8 {offsets = [0, 192], sizes = [2, 64], strides = [1, 1]} : vector<2x256xf32> to vector<2x64xf32>
    %24 = arith.negf %23 : vector<2x64xf32>
    %25 = math.exp %24 : vector<2x64xf32>
    %cst_9 = arith.constant 1.000000e+00 : f32
    %26 = vector.broadcast %cst_9 : f32 to vector<2x64xf32>
    %27 = arith.addf %26, %25 : vector<2x64xf32>
    %28 = arith.divf %26, %27 : vector<2x64xf32>
    %29 = arith.mulf %20, %5 : vector<2x64xf32>
    %30 = arith.mulf %14, %22 : vector<2x64xf32>
    %31 = arith.addf %29, %30 : vector<2x64xf32>
    %32 = math.tanh %31 : vector<2x64xf32>
    %33 = arith.mulf %28, %32 : vector<2x64xf32>
    %34 = vector.extract_strided_slice %3 {offsets = [2, 0], sizes = [2, 256], strides = [1, 1]} : vector<32x256xf32> to vector<2x256xf32>
    %cst_10 = arith.constant dense<0.000000e+00> : vector<2x256xf32>
    %35 = tpu.matmul %33, %1, %cst_10 {dimension_numbers = #tpu.dot_dimension_numbers<[1], [0], [0], [1], [0, 0, 1, 1], [], []>} : vector<2x64xf32>, vector<64x256xf32>, vector<2x256xf32> -> vector<2x256xf32>
    %36 = arith.addf %34, %35 : vector<2x256xf32>
    %37 = vector.extract_strided_slice %36 {offsets = [0, 0], sizes = [2, 64], strides = [1, 1]} : vector<2x256xf32> to vector<2x64xf32>
    %38 = arith.negf %37 : vector<2x64xf32>
    %39 = math.exp %38 : vector<2x64xf32>
    %cst_11 = arith.constant 1.000000e+00 : f32
    %40 = vector.broadcast %cst_11 : f32 to vector<2x64xf32>
    %41 = arith.addf %40, %39 : vector<2x64xf32>
    %42 = arith.divf %40, %41 : vector<2x64xf32>
    %43 = vector.extract_strided_slice %36 {offsets = [0, 64], sizes = [2, 64], strides = [1, 1]} : vector<2x256xf32> to vector<2x64xf32>
    %44 = arith.negf %43 : vector<2x64xf32>
    %45 = math.exp %44 : vector<2x64xf32>
    %cst_12 = arith.constant 1.000000e+00 : f32
    %46 = vector.broadcast %cst_12 : f32 to vector<2x64xf32>
    %47 = arith.addf %46, %45 : vector<2x64xf32>
    %48 = arith.divf %46, %47 : vector<2x64xf32>
    %49 = vector.extract_strided_slice %36 {offsets = [0, 128], sizes = [2, 64], strides = [1, 1]} : vector<2x256xf32> to vector<2x64xf32>
    %50 = math.tanh %49 : vector<2x64xf32>
    %51 = vector.extract_strided_slice %36 {offsets = [0, 192], sizes = [2, 64], strides = [1, 1]} : vector<2x256xf32> to vector<2x64xf32>
    %52 = arith.negf %51 : vector<2x64xf32>
    %53 = math.exp %52 : vector<2x64xf32>
    %cst_13 = arith.constant 1.000000e+00 : f32
    %54 = vector.broadcast %cst_13 : f32 to vector<2x64xf32>
    %55 = arith.addf %54, %53 : vector<2x64xf32>
    %56 = arith.divf %54, %55 : vector<2x64xf32>
    %57 = arith.mulf %48, %31 : vector<2x64xf32>
    %58 = arith.mulf %42, %50 : vector<2x64xf32>
    %59 = arith.addf %57, %58 : vector<2x64xf32>
    %60 = math.tanh %59 : vector<2x64xf32>
    %61 = arith.mulf %56, %60 : vector<2x64xf32>
    %62 = vector.extract_strided_slice %3 {offsets = [4, 0], sizes = [2, 256], strides = [1, 1]} : vector<32x256xf32> to vector<2x256xf32>
    %cst_14 = arith.constant dense<0.000000e+00> : vector<2x256xf32>
    %63 = tpu.matmul %61, %1, %cst_14 {dimension_numbers = #tpu.dot_dimension_numbers<[1], [0], [0], [1], [0, 0, 1, 1], [], []>} : vector<2x64xf32>, vector<64x256xf32>, vector<2x256xf32> -> vector<2x256xf32>
    %64 = arith.addf %62, %63 : vector<2x256xf32>
    %65 = vector.extract_strided_slice %64 {offsets = [0, 0], sizes = [2, 64], strides = [1, 1]} : vector<2x256xf32> to vector<2x64xf32>
    %66 = arith.negf %65 : vector<2x64xf32>
    %67 = math.exp %66 : vector<2x64xf32>
    %cst_15 = arith.constant 1.000000e+00 : f32
    %68 = vector.broadcast %cst_15 : f32 to vector<2x64xf32>
    %69 = arith.addf %68, %67 : vector<2x64xf32>
    %70 = arith.divf %68, %69 : vector<2x64xf32>
    %71 = vector.extract_strided_slice %64 {offsets = [0, 64], sizes = [2, 64], strides = [1, 1]} : vector<2x256xf32> to vector<2x64xf32>
    %72 = arith.negf %71 : vector<2x64xf32>
    %73 = math.exp %72 : vector<2x64xf32>
    %cst_16 = arith.constant 1.000000e+00 : f32
    %74 = vector.broadcast %cst_16 : f32 to vector<2x64xf32>
    %75 = arith.addf %74, %73 : vector<2x64xf32>
    %76 = arith.divf %74, %75 : vector<2x64xf32>
    %77 = vector.extract_strided_slice %64 {offsets = [0, 128], sizes = [2, 64], strides = [1, 1]} : vector<2x256xf32> to vector<2x64xf32>
    %78 = math.tanh %77 : vector<2x64xf32>
    %79 = vector.extract_strided_slice %64 {offsets = [0, 192], sizes = [2, 64], strides = [1, 1]} : vector<2x256xf32> to vector<2x64xf32>
    %80 = arith.negf %79 : vector<2x64xf32>
    %81 = math.exp %80 : vector<2x64xf32>
    %cst_17 = arith.constant 1.000000e+00 : f32
    %82 = vector.broadcast %cst_17 : f32 to vector<2x64xf32>
    %83 = arith.addf %82, %81 : vector<2x64xf32>
    %84 = arith.divf %82, %83 : vector<2x64xf32>
    %85 = arith.mulf %76, %59 : vector<2x64xf32>
    %86 = arith.mulf %70, %78 : vector<2x64xf32>
    %87 = arith.addf %85, %86 : vector<2x64xf32>
    %88 = math.tanh %87 : vector<2x64xf32>
    %89 = arith.mulf %84, %88 : vector<2x64xf32>
    %90 = vector.extract_strided_slice %3 {offsets = [6, 0], sizes = [2, 256], strides = [1, 1]} : vector<32x256xf32> to vector<2x256xf32>
    %cst_18 = arith.constant dense<0.000000e+00> : vector<2x256xf32>
    %91 = tpu.matmul %89, %1, %cst_18 {dimension_numbers = #tpu.dot_dimension_numbers<[1], [0], [0], [1], [0, 0, 1, 1], [], []>} : vector<2x64xf32>, vector<64x256xf32>, vector<2x256xf32> -> vector<2x256xf32>
    %92 = arith.addf %90, %91 : vector<2x256xf32>
    %93 = vector.extract_strided_slice %92 {offsets = [0, 0], sizes = [2, 64], strides = [1, 1]} : vector<2x256xf32> to vector<2x64xf32>
    %94 = arith.negf %93 : vector<2x64xf32>
    %95 = math.exp %94 : vector<2x64xf32>
    %cst_19 = arith.constant 1.000000e+00 : f32
    %96 = vector.broadcast %cst_19 : f32 to vector<2x64xf32>
    %97 = arith.addf %96, %95 : vector<2x64xf32>
    %98 = arith.divf %96, %97 : vector<2x64xf32>
    %99 = vector.extract_strided_slice %92 {offsets = [0, 64], sizes = [2, 64], strides = [1, 1]} : vector<2x256xf32> to vector<2x64xf32>
    %100 = arith.negf %99 : vector<2x64xf32>
    %101 = math.exp %100 : vector<2x64xf32>
    %cst_20 = arith.constant 1.000000e+00 : f32
    %102 = vector.broadcast %cst_20 : f32 to vector<2x64xf32>
    %103 = arith.addf %102, %101 : vector<2x64xf32>
    %104 = arith.divf %102, %103 : vector<2x64xf32>
    %105 = vector.extract_strided_slice %92 {offsets = [0, 128], sizes = [2, 64], strides = [1, 1]} : vector<2x256xf32> to vector<2x64xf32>
    %106 = math.tanh %105 : vector<2x64xf32>
    %107 = vector.extract_strided_slice %92 {offsets = [0, 192], sizes = [2, 64], strides = [1, 1]} : vector<2x256xf32> to vector<2x64xf32>
    %108 = arith.negf %107 : vector<2x64xf32>
    %109 = math.exp %108 : vector<2x64xf32>
    %cst_21 = arith.constant 1.000000e+00 : f32
    %110 = vector.broadcast %cst_21 : f32 to vector<2x64xf32>
    %111 = arith.addf %110, %109 : vector<2x64xf32>
    %112 = arith.divf %110, %111 : vector<2x64xf32>
    %113 = arith.mulf %104, %87 : vector<2x64xf32>
    %114 = arith.mulf %98, %106 : vector<2x64xf32>
    %115 = arith.addf %113, %114 : vector<2x64xf32>
    %116 = math.tanh %115 : vector<2x64xf32>
    %117 = arith.mulf %112, %116 : vector<2x64xf32>
    %118 = vector.extract_strided_slice %3 {offsets = [8, 0], sizes = [2, 256], strides = [1, 1]} : vector<32x256xf32> to vector<2x256xf32>
    %cst_22 = arith.constant dense<0.000000e+00> : vector<2x256xf32>
    %119 = tpu.matmul %117, %1, %cst_22 {dimension_numbers = #tpu.dot_dimension_numbers<[1], [0], [0], [1], [0, 0, 1, 1], [], []>} : vector<2x64xf32>, vector<64x256xf32>, vector<2x256xf32> -> vector<2x256xf32>
    %120 = arith.addf %118, %119 : vector<2x256xf32>
    %121 = vector.extract_strided_slice %120 {offsets = [0, 0], sizes = [2, 64], strides = [1, 1]} : vector<2x256xf32> to vector<2x64xf32>
    %122 = arith.negf %121 : vector<2x64xf32>
    %123 = math.exp %122 : vector<2x64xf32>
    %cst_23 = arith.constant 1.000000e+00 : f32
    %124 = vector.broadcast %cst_23 : f32 to vector<2x64xf32>
    %125 = arith.addf %124, %123 : vector<2x64xf32>
    %126 = arith.divf %124, %125 : vector<2x64xf32>
    %127 = vector.extract_strided_slice %120 {offsets = [0, 64], sizes = [2, 64], strides = [1, 1]} : vector<2x256xf32> to vector<2x64xf32>
    %128 = arith.negf %127 : vector<2x64xf32>
    %129 = math.exp %128 : vector<2x64xf32>
    %cst_24 = arith.constant 1.000000e+00 : f32
    %130 = vector.broadcast %cst_24 : f32 to vector<2x64xf32>
    %131 = arith.addf %130, %129 : vector<2x64xf32>
    %132 = arith.divf %130, %131 : vector<2x64xf32>
    %133 = vector.extract_strided_slice %120 {offsets = [0, 128], sizes = [2, 64], strides = [1, 1]} : vector<2x256xf32> to vector<2x64xf32>
    %134 = math.tanh %133 : vector<2x64xf32>
    %135 = vector.extract_strided_slice %120 {offsets = [0, 192], sizes = [2, 64], strides = [1, 1]} : vector<2x256xf32> to vector<2x64xf32>
    %136 = arith.negf %135 : vector<2x64xf32>
    %137 = math.exp %136 : vector<2x64xf32>
    %cst_25 = arith.constant 1.000000e+00 : f32
    %138 = vector.broadcast %cst_25 : f32 to vector<2x64xf32>
    %139 = arith.addf %138, %137 : vector<2x64xf32>
    %140 = arith.divf %138, %139 : vector<2x64xf32>
    %141 = arith.mulf %132, %115 : vector<2x64xf32>
    %142 = arith.mulf %126, %134 : vector<2x64xf32>
    %143 = arith.addf %141, %142 : vector<2x64xf32>
    %144 = math.tanh %143 : vector<2x64xf32>
    %145 = arith.mulf %140, %144 : vector<2x64xf32>
    %146 = vector.extract_strided_slice %3 {offsets = [10, 0], sizes = [2, 256], strides = [1, 1]} : vector<32x256xf32> to vector<2x256xf32>
    %cst_26 = arith.constant dense<0.000000e+00> : vector<2x256xf32>
    %147 = tpu.matmul %145, %1, %cst_26 {dimension_numbers = #tpu.dot_dimension_numbers<[1], [0], [0], [1], [0, 0, 1, 1], [], []>} : vector<2x64xf32>, vector<64x256xf32>, vector<2x256xf32> -> vector<2x256xf32>
    %148 = arith.addf %146, %147 : vector<2x256xf32>
    %149 = vector.extract_strided_slice %148 {offsets = [0, 0], sizes = [2, 64], strides = [1, 1]} : vector<2x256xf32> to vector<2x64xf32>
    %150 = arith.negf %149 : vector<2x64xf32>
    %151 = math.exp %150 : vector<2x64xf32>
    %cst_27 = arith.constant 1.000000e+00 : f32
    %152 = vector.broadcast %cst_27 : f32 to vector<2x64xf32>
    %153 = arith.addf %152, %151 : vector<2x64xf32>
    %154 = arith.divf %152, %153 : vector<2x64xf32>
    %155 = vector.extract_strided_slice %148 {offsets = [0, 64], sizes = [2, 64], strides = [1, 1]} : vector<2x256xf32> to vector<2x64xf32>
    %156 = arith.negf %155 : vector<2x64xf32>
    %157 = math.exp %156 : vector<2x64xf32>
    %cst_28 = arith.constant 1.000000e+00 : f32
    %158 = vector.broadcast %cst_28 : f32 to vector<2x64xf32>
    %159 = arith.addf %158, %157 : vector<2x64xf32>
    %160 = arith.divf %158, %159 : vector<2x64xf32>
    %161 = vector.extract_strided_slice %148 {offsets = [0, 128], sizes = [2, 64], strides = [1, 1]} : vector<2x256xf32> to vector<2x64xf32>
    %162 = math.tanh %161 : vector<2x64xf32>
    %163 = vector.extract_strided_slice %148 {offsets = [0, 192], sizes = [2, 64], strides = [1, 1]} : vector<2x256xf32> to vector<2x64xf32>
    %164 = arith.negf %163 : vector<2x64xf32>
    %165 = math.exp %164 : vector<2x64xf32>
    %cst_29 = arith.constant 1.000000e+00 : f32
    %166 = vector.broadcast %cst_29 : f32 to vector<2x64xf32>
    %167 = arith.addf %166, %165 : vector<2x64xf32>
    %168 = arith.divf %166, %167 : vector<2x64xf32>
    %169 = arith.mulf %160, %143 : vector<2x64xf32>
    %170 = arith.mulf %154, %162 : vector<2x64xf32>
    %171 = arith.addf %169, %170 : vector<2x64xf32>
    %172 = math.tanh %171 : vector<2x64xf32>
    %173 = arith.mulf %168, %172 : vector<2x64xf32>
    %174 = vector.extract_strided_slice %3 {offsets = [12, 0], sizes = [2, 256], strides = [1, 1]} : vector<32x256xf32> to vector<2x256xf32>
    %cst_30 = arith.constant dense<0.000000e+00> : vector<2x256xf32>
    %175 = tpu.matmul %173, %1, %cst_30 {dimension_numbers = #tpu.dot_dimension_numbers<[1], [0], [0], [1], [0, 0, 1, 1], [], []>} : vector<2x64xf32>, vector<64x256xf32>, vector<2x256xf32> -> vector<2x256xf32>
    %176 = arith.addf %174, %175 : vector<2x256xf32>
    %177 = vector.extract_strided_slice %176 {offsets = [0, 0], sizes = [2, 64], strides = [1, 1]} : vector<2x256xf32> to vector<2x64xf32>
    %178 = arith.negf %177 : vector<2x64xf32>
    %179 = math.exp %178 : vector<2x64xf32>
    %cst_31 = arith.constant 1.000000e+00 : f32
    %180 = vector.broadcast %cst_31 : f32 to vector<2x64xf32>
    %181 = arith.addf %180, %179 : vector<2x64xf32>
    %182 = arith.divf %180, %181 : vector<2x64xf32>
    %183 = vector.extract_strided_slice %176 {offsets = [0, 64], sizes = [2, 64], strides = [1, 1]} : vector<2x256xf32> to vector<2x64xf32>
    %184 = arith.negf %183 : vector<2x64xf32>
    %185 = math.exp %184 : vector<2x64xf32>
    %cst_32 = arith.constant 1.000000e+00 : f32
    %186 = vector.broadcast %cst_32 : f32 to vector<2x64xf32>
    %187 = arith.addf %186, %185 : vector<2x64xf32>
    %188 = arith.divf %186, %187 : vector<2x64xf32>
    %189 = vector.extract_strided_slice %176 {offsets = [0, 128], sizes = [2, 64], strides = [1, 1]} : vector<2x256xf32> to vector<2x64xf32>
    %190 = math.tanh %189 : vector<2x64xf32>
    %191 = vector.extract_strided_slice %176 {offsets = [0, 192], sizes = [2, 64], strides = [1, 1]} : vector<2x256xf32> to vector<2x64xf32>
    %192 = arith.negf %191 : vector<2x64xf32>
    %193 = math.exp %192 : vector<2x64xf32>
    %cst_33 = arith.constant 1.000000e+00 : f32
    %194 = vector.broadcast %cst_33 : f32 to vector<2x64xf32>
    %195 = arith.addf %194, %193 : vector<2x64xf32>
    %196 = arith.divf %194, %195 : vector<2x64xf32>
    %197 = arith.mulf %188, %171 : vector<2x64xf32>
    %198 = arith.mulf %182, %190 : vector<2x64xf32>
    %199 = arith.addf %197, %198 : vector<2x64xf32>
    %200 = math.tanh %199 : vector<2x64xf32>
    %201 = arith.mulf %196, %200 : vector<2x64xf32>
    %202 = vector.extract_strided_slice %3 {offsets = [14, 0], sizes = [2, 256], strides = [1, 1]} : vector<32x256xf32> to vector<2x256xf32>
    %cst_34 = arith.constant dense<0.000000e+00> : vector<2x256xf32>
    %203 = tpu.matmul %201, %1, %cst_34 {dimension_numbers = #tpu.dot_dimension_numbers<[1], [0], [0], [1], [0, 0, 1, 1], [], []>} : vector<2x64xf32>, vector<64x256xf32>, vector<2x256xf32> -> vector<2x256xf32>
    %204 = arith.addf %202, %203 : vector<2x256xf32>
    %205 = vector.extract_strided_slice %204 {offsets = [0, 0], sizes = [2, 64], strides = [1, 1]} : vector<2x256xf32> to vector<2x64xf32>
    %206 = arith.negf %205 : vector<2x64xf32>
    %207 = math.exp %206 : vector<2x64xf32>
    %cst_35 = arith.constant 1.000000e+00 : f32
    %208 = vector.broadcast %cst_35 : f32 to vector<2x64xf32>
    %209 = arith.addf %208, %207 : vector<2x64xf32>
    %210 = arith.divf %208, %209 : vector<2x64xf32>
    %211 = vector.extract_strided_slice %204 {offsets = [0, 64], sizes = [2, 64], strides = [1, 1]} : vector<2x256xf32> to vector<2x64xf32>
    %212 = arith.negf %211 : vector<2x64xf32>
    %213 = math.exp %212 : vector<2x64xf32>
    %cst_36 = arith.constant 1.000000e+00 : f32
    %214 = vector.broadcast %cst_36 : f32 to vector<2x64xf32>
    %215 = arith.addf %214, %213 : vector<2x64xf32>
    %216 = arith.divf %214, %215 : vector<2x64xf32>
    %217 = vector.extract_strided_slice %204 {offsets = [0, 128], sizes = [2, 64], strides = [1, 1]} : vector<2x256xf32> to vector<2x64xf32>
    %218 = math.tanh %217 : vector<2x64xf32>
    %219 = vector.extract_strided_slice %204 {offsets = [0, 192], sizes = [2, 64], strides = [1, 1]} : vector<2x256xf32> to vector<2x64xf32>
    %220 = arith.negf %219 : vector<2x64xf32>
    %221 = math.exp %220 : vector<2x64xf32>
    %cst_37 = arith.constant 1.000000e+00 : f32
    %222 = vector.broadcast %cst_37 : f32 to vector<2x64xf32>
    %223 = arith.addf %222, %221 : vector<2x64xf32>
    %224 = arith.divf %222, %223 : vector<2x64xf32>
    %225 = arith.mulf %216, %199 : vector<2x64xf32>
    %226 = arith.mulf %210, %218 : vector<2x64xf32>
    %227 = arith.addf %225, %226 : vector<2x64xf32>
    %228 = math.tanh %227 : vector<2x64xf32>
    %229 = arith.mulf %224, %228 : vector<2x64xf32>
    %230 = vector.extract_strided_slice %3 {offsets = [16, 0], sizes = [2, 256], strides = [1, 1]} : vector<32x256xf32> to vector<2x256xf32>
    %cst_38 = arith.constant dense<0.000000e+00> : vector<2x256xf32>
    %231 = tpu.matmul %229, %1, %cst_38 {dimension_numbers = #tpu.dot_dimension_numbers<[1], [0], [0], [1], [0, 0, 1, 1], [], []>} : vector<2x64xf32>, vector<64x256xf32>, vector<2x256xf32> -> vector<2x256xf32>
    %232 = arith.addf %230, %231 : vector<2x256xf32>
    %233 = vector.extract_strided_slice %232 {offsets = [0, 0], sizes = [2, 64], strides = [1, 1]} : vector<2x256xf32> to vector<2x64xf32>
    %234 = arith.negf %233 : vector<2x64xf32>
    %235 = math.exp %234 : vector<2x64xf32>
    %cst_39 = arith.constant 1.000000e+00 : f32
    %236 = vector.broadcast %cst_39 : f32 to vector<2x64xf32>
    %237 = arith.addf %236, %235 : vector<2x64xf32>
    %238 = arith.divf %236, %237 : vector<2x64xf32>
    %239 = vector.extract_strided_slice %232 {offsets = [0, 64], sizes = [2, 64], strides = [1, 1]} : vector<2x256xf32> to vector<2x64xf32>
    %240 = arith.negf %239 : vector<2x64xf32>
    %241 = math.exp %240 : vector<2x64xf32>
    %cst_40 = arith.constant 1.000000e+00 : f32
    %242 = vector.broadcast %cst_40 : f32 to vector<2x64xf32>
    %243 = arith.addf %242, %241 : vector<2x64xf32>
    %244 = arith.divf %242, %243 : vector<2x64xf32>
    %245 = vector.extract_strided_slice %232 {offsets = [0, 128], sizes = [2, 64], strides = [1, 1]} : vector<2x256xf32> to vector<2x64xf32>
    %246 = math.tanh %245 : vector<2x64xf32>
    %247 = vector.extract_strided_slice %232 {offsets = [0, 192], sizes = [2, 64], strides = [1, 1]} : vector<2x256xf32> to vector<2x64xf32>
    %248 = arith.negf %247 : vector<2x64xf32>
    %249 = math.exp %248 : vector<2x64xf32>
    %cst_41 = arith.constant 1.000000e+00 : f32
    %250 = vector.broadcast %cst_41 : f32 to vector<2x64xf32>
    %251 = arith.addf %250, %249 : vector<2x64xf32>
    %252 = arith.divf %250, %251 : vector<2x64xf32>
    %253 = arith.mulf %244, %227 : vector<2x64xf32>
    %254 = arith.mulf %238, %246 : vector<2x64xf32>
    %255 = arith.addf %253, %254 : vector<2x64xf32>
    %256 = math.tanh %255 : vector<2x64xf32>
    %257 = arith.mulf %252, %256 : vector<2x64xf32>
    %258 = vector.extract_strided_slice %3 {offsets = [18, 0], sizes = [2, 256], strides = [1, 1]} : vector<32x256xf32> to vector<2x256xf32>
    %cst_42 = arith.constant dense<0.000000e+00> : vector<2x256xf32>
    %259 = tpu.matmul %257, %1, %cst_42 {dimension_numbers = #tpu.dot_dimension_numbers<[1], [0], [0], [1], [0, 0, 1, 1], [], []>} : vector<2x64xf32>, vector<64x256xf32>, vector<2x256xf32> -> vector<2x256xf32>
    %260 = arith.addf %258, %259 : vector<2x256xf32>
    %261 = vector.extract_strided_slice %260 {offsets = [0, 0], sizes = [2, 64], strides = [1, 1]} : vector<2x256xf32> to vector<2x64xf32>
    %262 = arith.negf %261 : vector<2x64xf32>
    %263 = math.exp %262 : vector<2x64xf32>
    %cst_43 = arith.constant 1.000000e+00 : f32
    %264 = vector.broadcast %cst_43 : f32 to vector<2x64xf32>
    %265 = arith.addf %264, %263 : vector<2x64xf32>
    %266 = arith.divf %264, %265 : vector<2x64xf32>
    %267 = vector.extract_strided_slice %260 {offsets = [0, 64], sizes = [2, 64], strides = [1, 1]} : vector<2x256xf32> to vector<2x64xf32>
    %268 = arith.negf %267 : vector<2x64xf32>
    %269 = math.exp %268 : vector<2x64xf32>
    %cst_44 = arith.constant 1.000000e+00 : f32
    %270 = vector.broadcast %cst_44 : f32 to vector<2x64xf32>
    %271 = arith.addf %270, %269 : vector<2x64xf32>
    %272 = arith.divf %270, %271 : vector<2x64xf32>
    %273 = vector.extract_strided_slice %260 {offsets = [0, 128], sizes = [2, 64], strides = [1, 1]} : vector<2x256xf32> to vector<2x64xf32>
    %274 = math.tanh %273 : vector<2x64xf32>
    %275 = vector.extract_strided_slice %260 {offsets = [0, 192], sizes = [2, 64], strides = [1, 1]} : vector<2x256xf32> to vector<2x64xf32>
    %276 = arith.negf %275 : vector<2x64xf32>
    %277 = math.exp %276 : vector<2x64xf32>
    %cst_45 = arith.constant 1.000000e+00 : f32
    %278 = vector.broadcast %cst_45 : f32 to vector<2x64xf32>
    %279 = arith.addf %278, %277 : vector<2x64xf32>
    %280 = arith.divf %278, %279 : vector<2x64xf32>
    %281 = arith.mulf %272, %255 : vector<2x64xf32>
    %282 = arith.mulf %266, %274 : vector<2x64xf32>
    %283 = arith.addf %281, %282 : vector<2x64xf32>
    %284 = math.tanh %283 : vector<2x64xf32>
    %285 = arith.mulf %280, %284 : vector<2x64xf32>
    %286 = vector.extract_strided_slice %3 {offsets = [20, 0], sizes = [2, 256], strides = [1, 1]} : vector<32x256xf32> to vector<2x256xf32>
    %cst_46 = arith.constant dense<0.000000e+00> : vector<2x256xf32>
    %287 = tpu.matmul %285, %1, %cst_46 {dimension_numbers = #tpu.dot_dimension_numbers<[1], [0], [0], [1], [0, 0, 1, 1], [], []>} : vector<2x64xf32>, vector<64x256xf32>, vector<2x256xf32> -> vector<2x256xf32>
    %288 = arith.addf %286, %287 : vector<2x256xf32>
    %289 = vector.extract_strided_slice %288 {offsets = [0, 0], sizes = [2, 64], strides = [1, 1]} : vector<2x256xf32> to vector<2x64xf32>
    %290 = arith.negf %289 : vector<2x64xf32>
    %291 = math.exp %290 : vector<2x64xf32>
    %cst_47 = arith.constant 1.000000e+00 : f32
    %292 = vector.broadcast %cst_47 : f32 to vector<2x64xf32>
    %293 = arith.addf %292, %291 : vector<2x64xf32>
    %294 = arith.divf %292, %293 : vector<2x64xf32>
    %295 = vector.extract_strided_slice %288 {offsets = [0, 64], sizes = [2, 64], strides = [1, 1]} : vector<2x256xf32> to vector<2x64xf32>
    %296 = arith.negf %295 : vector<2x64xf32>
    %297 = math.exp %296 : vector<2x64xf32>
    %cst_48 = arith.constant 1.000000e+00 : f32
    %298 = vector.broadcast %cst_48 : f32 to vector<2x64xf32>
    %299 = arith.addf %298, %297 : vector<2x64xf32>
    %300 = arith.divf %298, %299 : vector<2x64xf32>
    %301 = vector.extract_strided_slice %288 {offsets = [0, 128], sizes = [2, 64], strides = [1, 1]} : vector<2x256xf32> to vector<2x64xf32>
    %302 = math.tanh %301 : vector<2x64xf32>
    %303 = vector.extract_strided_slice %288 {offsets = [0, 192], sizes = [2, 64], strides = [1, 1]} : vector<2x256xf32> to vector<2x64xf32>
    %304 = arith.negf %303 : vector<2x64xf32>
    %305 = math.exp %304 : vector<2x64xf32>
    %cst_49 = arith.constant 1.000000e+00 : f32
    %306 = vector.broadcast %cst_49 : f32 to vector<2x64xf32>
    %307 = arith.addf %306, %305 : vector<2x64xf32>
    %308 = arith.divf %306, %307 : vector<2x64xf32>
    %309 = arith.mulf %300, %283 : vector<2x64xf32>
    %310 = arith.mulf %294, %302 : vector<2x64xf32>
    %311 = arith.addf %309, %310 : vector<2x64xf32>
    %312 = math.tanh %311 : vector<2x64xf32>
    %313 = arith.mulf %308, %312 : vector<2x64xf32>
    %314 = vector.extract_strided_slice %3 {offsets = [22, 0], sizes = [2, 256], strides = [1, 1]} : vector<32x256xf32> to vector<2x256xf32>
    %cst_50 = arith.constant dense<0.000000e+00> : vector<2x256xf32>
    %315 = tpu.matmul %313, %1, %cst_50 {dimension_numbers = #tpu.dot_dimension_numbers<[1], [0], [0], [1], [0, 0, 1, 1], [], []>} : vector<2x64xf32>, vector<64x256xf32>, vector<2x256xf32> -> vector<2x256xf32>
    %316 = arith.addf %314, %315 : vector<2x256xf32>
    %317 = vector.extract_strided_slice %316 {offsets = [0, 0], sizes = [2, 64], strides = [1, 1]} : vector<2x256xf32> to vector<2x64xf32>
    %318 = arith.negf %317 : vector<2x64xf32>
    %319 = math.exp %318 : vector<2x64xf32>
    %cst_51 = arith.constant 1.000000e+00 : f32
    %320 = vector.broadcast %cst_51 : f32 to vector<2x64xf32>
    %321 = arith.addf %320, %319 : vector<2x64xf32>
    %322 = arith.divf %320, %321 : vector<2x64xf32>
    %323 = vector.extract_strided_slice %316 {offsets = [0, 64], sizes = [2, 64], strides = [1, 1]} : vector<2x256xf32> to vector<2x64xf32>
    %324 = arith.negf %323 : vector<2x64xf32>
    %325 = math.exp %324 : vector<2x64xf32>
    %cst_52 = arith.constant 1.000000e+00 : f32
    %326 = vector.broadcast %cst_52 : f32 to vector<2x64xf32>
    %327 = arith.addf %326, %325 : vector<2x64xf32>
    %328 = arith.divf %326, %327 : vector<2x64xf32>
    %329 = vector.extract_strided_slice %316 {offsets = [0, 128], sizes = [2, 64], strides = [1, 1]} : vector<2x256xf32> to vector<2x64xf32>
    %330 = math.tanh %329 : vector<2x64xf32>
    %331 = vector.extract_strided_slice %316 {offsets = [0, 192], sizes = [2, 64], strides = [1, 1]} : vector<2x256xf32> to vector<2x64xf32>
    %332 = arith.negf %331 : vector<2x64xf32>
    %333 = math.exp %332 : vector<2x64xf32>
    %cst_53 = arith.constant 1.000000e+00 : f32
    %334 = vector.broadcast %cst_53 : f32 to vector<2x64xf32>
    %335 = arith.addf %334, %333 : vector<2x64xf32>
    %336 = arith.divf %334, %335 : vector<2x64xf32>
    %337 = arith.mulf %328, %311 : vector<2x64xf32>
    %338 = arith.mulf %322, %330 : vector<2x64xf32>
    %339 = arith.addf %337, %338 : vector<2x64xf32>
    %340 = math.tanh %339 : vector<2x64xf32>
    %341 = arith.mulf %336, %340 : vector<2x64xf32>
    %342 = vector.extract_strided_slice %3 {offsets = [24, 0], sizes = [2, 256], strides = [1, 1]} : vector<32x256xf32> to vector<2x256xf32>
    %cst_54 = arith.constant dense<0.000000e+00> : vector<2x256xf32>
    %343 = tpu.matmul %341, %1, %cst_54 {dimension_numbers = #tpu.dot_dimension_numbers<[1], [0], [0], [1], [0, 0, 1, 1], [], []>} : vector<2x64xf32>, vector<64x256xf32>, vector<2x256xf32> -> vector<2x256xf32>
    %344 = arith.addf %342, %343 : vector<2x256xf32>
    %345 = vector.extract_strided_slice %344 {offsets = [0, 0], sizes = [2, 64], strides = [1, 1]} : vector<2x256xf32> to vector<2x64xf32>
    %346 = arith.negf %345 : vector<2x64xf32>
    %347 = math.exp %346 : vector<2x64xf32>
    %cst_55 = arith.constant 1.000000e+00 : f32
    %348 = vector.broadcast %cst_55 : f32 to vector<2x64xf32>
    %349 = arith.addf %348, %347 : vector<2x64xf32>
    %350 = arith.divf %348, %349 : vector<2x64xf32>
    %351 = vector.extract_strided_slice %344 {offsets = [0, 64], sizes = [2, 64], strides = [1, 1]} : vector<2x256xf32> to vector<2x64xf32>
    %352 = arith.negf %351 : vector<2x64xf32>
    %353 = math.exp %352 : vector<2x64xf32>
    %cst_56 = arith.constant 1.000000e+00 : f32
    %354 = vector.broadcast %cst_56 : f32 to vector<2x64xf32>
    %355 = arith.addf %354, %353 : vector<2x64xf32>
    %356 = arith.divf %354, %355 : vector<2x64xf32>
    %357 = vector.extract_strided_slice %344 {offsets = [0, 128], sizes = [2, 64], strides = [1, 1]} : vector<2x256xf32> to vector<2x64xf32>
    %358 = math.tanh %357 : vector<2x64xf32>
    %359 = vector.extract_strided_slice %344 {offsets = [0, 192], sizes = [2, 64], strides = [1, 1]} : vector<2x256xf32> to vector<2x64xf32>
    %360 = arith.negf %359 : vector<2x64xf32>
    %361 = math.exp %360 : vector<2x64xf32>
    %cst_57 = arith.constant 1.000000e+00 : f32
    %362 = vector.broadcast %cst_57 : f32 to vector<2x64xf32>
    %363 = arith.addf %362, %361 : vector<2x64xf32>
    %364 = arith.divf %362, %363 : vector<2x64xf32>
    %365 = arith.mulf %356, %339 : vector<2x64xf32>
    %366 = arith.mulf %350, %358 : vector<2x64xf32>
    %367 = arith.addf %365, %366 : vector<2x64xf32>
    %368 = math.tanh %367 : vector<2x64xf32>
    %369 = arith.mulf %364, %368 : vector<2x64xf32>
    %370 = vector.extract_strided_slice %3 {offsets = [26, 0], sizes = [2, 256], strides = [1, 1]} : vector<32x256xf32> to vector<2x256xf32>
    %cst_58 = arith.constant dense<0.000000e+00> : vector<2x256xf32>
    %371 = tpu.matmul %369, %1, %cst_58 {dimension_numbers = #tpu.dot_dimension_numbers<[1], [0], [0], [1], [0, 0, 1, 1], [], []>} : vector<2x64xf32>, vector<64x256xf32>, vector<2x256xf32> -> vector<2x256xf32>
    %372 = arith.addf %370, %371 : vector<2x256xf32>
    %373 = vector.extract_strided_slice %372 {offsets = [0, 0], sizes = [2, 64], strides = [1, 1]} : vector<2x256xf32> to vector<2x64xf32>
    %374 = arith.negf %373 : vector<2x64xf32>
    %375 = math.exp %374 : vector<2x64xf32>
    %cst_59 = arith.constant 1.000000e+00 : f32
    %376 = vector.broadcast %cst_59 : f32 to vector<2x64xf32>
    %377 = arith.addf %376, %375 : vector<2x64xf32>
    %378 = arith.divf %376, %377 : vector<2x64xf32>
    %379 = vector.extract_strided_slice %372 {offsets = [0, 64], sizes = [2, 64], strides = [1, 1]} : vector<2x256xf32> to vector<2x64xf32>
    %380 = arith.negf %379 : vector<2x64xf32>
    %381 = math.exp %380 : vector<2x64xf32>
    %cst_60 = arith.constant 1.000000e+00 : f32
    %382 = vector.broadcast %cst_60 : f32 to vector<2x64xf32>
    %383 = arith.addf %382, %381 : vector<2x64xf32>
    %384 = arith.divf %382, %383 : vector<2x64xf32>
    %385 = vector.extract_strided_slice %372 {offsets = [0, 128], sizes = [2, 64], strides = [1, 1]} : vector<2x256xf32> to vector<2x64xf32>
    %386 = math.tanh %385 : vector<2x64xf32>
    %387 = vector.extract_strided_slice %372 {offsets = [0, 192], sizes = [2, 64], strides = [1, 1]} : vector<2x256xf32> to vector<2x64xf32>
    %388 = arith.negf %387 : vector<2x64xf32>
    %389 = math.exp %388 : vector<2x64xf32>
    %cst_61 = arith.constant 1.000000e+00 : f32
    %390 = vector.broadcast %cst_61 : f32 to vector<2x64xf32>
    %391 = arith.addf %390, %389 : vector<2x64xf32>
    %392 = arith.divf %390, %391 : vector<2x64xf32>
    %393 = arith.mulf %384, %367 : vector<2x64xf32>
    %394 = arith.mulf %378, %386 : vector<2x64xf32>
    %395 = arith.addf %393, %394 : vector<2x64xf32>
    %396 = math.tanh %395 : vector<2x64xf32>
    %397 = arith.mulf %392, %396 : vector<2x64xf32>
    %398 = vector.extract_strided_slice %3 {offsets = [28, 0], sizes = [2, 256], strides = [1, 1]} : vector<32x256xf32> to vector<2x256xf32>
    %cst_62 = arith.constant dense<0.000000e+00> : vector<2x256xf32>
    %399 = tpu.matmul %397, %1, %cst_62 {dimension_numbers = #tpu.dot_dimension_numbers<[1], [0], [0], [1], [0, 0, 1, 1], [], []>} : vector<2x64xf32>, vector<64x256xf32>, vector<2x256xf32> -> vector<2x256xf32>
    %400 = arith.addf %398, %399 : vector<2x256xf32>
    %401 = vector.extract_strided_slice %400 {offsets = [0, 0], sizes = [2, 64], strides = [1, 1]} : vector<2x256xf32> to vector<2x64xf32>
    %402 = arith.negf %401 : vector<2x64xf32>
    %403 = math.exp %402 : vector<2x64xf32>
    %cst_63 = arith.constant 1.000000e+00 : f32
    %404 = vector.broadcast %cst_63 : f32 to vector<2x64xf32>
    %405 = arith.addf %404, %403 : vector<2x64xf32>
    %406 = arith.divf %404, %405 : vector<2x64xf32>
    %407 = vector.extract_strided_slice %400 {offsets = [0, 64], sizes = [2, 64], strides = [1, 1]} : vector<2x256xf32> to vector<2x64xf32>
    %408 = arith.negf %407 : vector<2x64xf32>
    %409 = math.exp %408 : vector<2x64xf32>
    %cst_64 = arith.constant 1.000000e+00 : f32
    %410 = vector.broadcast %cst_64 : f32 to vector<2x64xf32>
    %411 = arith.addf %410, %409 : vector<2x64xf32>
    %412 = arith.divf %410, %411 : vector<2x64xf32>
    %413 = vector.extract_strided_slice %400 {offsets = [0, 128], sizes = [2, 64], strides = [1, 1]} : vector<2x256xf32> to vector<2x64xf32>
    %414 = math.tanh %413 : vector<2x64xf32>
    %415 = vector.extract_strided_slice %400 {offsets = [0, 192], sizes = [2, 64], strides = [1, 1]} : vector<2x256xf32> to vector<2x64xf32>
    %416 = arith.negf %415 : vector<2x64xf32>
    %417 = math.exp %416 : vector<2x64xf32>
    %cst_65 = arith.constant 1.000000e+00 : f32
    %418 = vector.broadcast %cst_65 : f32 to vector<2x64xf32>
    %419 = arith.addf %418, %417 : vector<2x64xf32>
    %420 = arith.divf %418, %419 : vector<2x64xf32>
    %421 = arith.mulf %412, %395 : vector<2x64xf32>
    %422 = arith.mulf %406, %414 : vector<2x64xf32>
    %423 = arith.addf %421, %422 : vector<2x64xf32>
    %424 = math.tanh %423 : vector<2x64xf32>
    %425 = arith.mulf %420, %424 : vector<2x64xf32>
    %426 = vector.extract_strided_slice %3 {offsets = [30, 0], sizes = [2, 256], strides = [1, 1]} : vector<32x256xf32> to vector<2x256xf32>
    %cst_66 = arith.constant dense<0.000000e+00> : vector<2x256xf32>
    %427 = tpu.matmul %425, %1, %cst_66 {dimension_numbers = #tpu.dot_dimension_numbers<[1], [0], [0], [1], [0, 0, 1, 1], [], []>} : vector<2x64xf32>, vector<64x256xf32>, vector<2x256xf32> -> vector<2x256xf32>
    %428 = arith.addf %426, %427 : vector<2x256xf32>
    %429 = vector.extract_strided_slice %428 {offsets = [0, 0], sizes = [2, 64], strides = [1, 1]} : vector<2x256xf32> to vector<2x64xf32>
    %430 = arith.negf %429 : vector<2x64xf32>
    %431 = math.exp %430 : vector<2x64xf32>
    %cst_67 = arith.constant 1.000000e+00 : f32
    %432 = vector.broadcast %cst_67 : f32 to vector<2x64xf32>
    %433 = arith.addf %432, %431 : vector<2x64xf32>
    %434 = arith.divf %432, %433 : vector<2x64xf32>
    %435 = vector.extract_strided_slice %428 {offsets = [0, 64], sizes = [2, 64], strides = [1, 1]} : vector<2x256xf32> to vector<2x64xf32>
    %436 = arith.negf %435 : vector<2x64xf32>
    %437 = math.exp %436 : vector<2x64xf32>
    %cst_68 = arith.constant 1.000000e+00 : f32
    %438 = vector.broadcast %cst_68 : f32 to vector<2x64xf32>
    %439 = arith.addf %438, %437 : vector<2x64xf32>
    %440 = arith.divf %438, %439 : vector<2x64xf32>
    %441 = vector.extract_strided_slice %428 {offsets = [0, 128], sizes = [2, 64], strides = [1, 1]} : vector<2x256xf32> to vector<2x64xf32>
    %442 = math.tanh %441 : vector<2x64xf32>
    %443 = vector.extract_strided_slice %428 {offsets = [0, 192], sizes = [2, 64], strides = [1, 1]} : vector<2x256xf32> to vector<2x64xf32>
    %444 = arith.negf %443 : vector<2x64xf32>
    %445 = math.exp %444 : vector<2x64xf32>
    %cst_69 = arith.constant 1.000000e+00 : f32
    %446 = vector.broadcast %cst_69 : f32 to vector<2x64xf32>
    %447 = arith.addf %446, %445 : vector<2x64xf32>
    %448 = arith.divf %446, %447 : vector<2x64xf32>
    %449 = arith.mulf %440, %423 : vector<2x64xf32>
    %450 = arith.mulf %434, %442 : vector<2x64xf32>
    %451 = arith.addf %449, %450 : vector<2x64xf32>
    %452 = math.tanh %451 : vector<2x64xf32>
    %453 = arith.mulf %448, %452 : vector<2x64xf32>
    %c0_70 = arith.constant 0 : index
    %c0_71 = arith.constant 0 : index
    %454 = vector.load %arg2[%c0_70, %c0_71] : memref<96x16xf32, #tpu.memory_space<vmem>>, vector<64x16xf32>
    %c64 = arith.constant 64 : index
    %c0_72 = arith.constant 0 : index
    %455 = vector.load %arg2[%c64, %c0_72] : memref<96x16xf32, #tpu.memory_space<vmem>>, vector<1x16xf32>
    %c72 = arith.constant 72 : index
    %c0_73 = arith.constant 0 : index
    %456 = vector.load %arg2[%c72, %c0_73] : memref<96x16xf32, #tpu.memory_space<vmem>>, vector<16x1xf32>
    %c88 = arith.constant 88 : index
    %c0_74 = arith.constant 0 : index
    %457 = vector.load %arg2[%c88, %c0_74] : memref<96x16xf32, #tpu.memory_space<vmem>>, vector<1x1xf32>
    %cst_75 = arith.constant dense<0.000000e+00> : vector<2x16xf32>
    %458 = tpu.matmul %453, %454, %cst_75 {dimension_numbers = #tpu.dot_dimension_numbers<[1], [0], [0], [1], [0, 0, 1, 1], [], []>} : vector<2x64xf32>, vector<64x16xf32>, vector<2x16xf32> -> vector<2x16xf32>
    %459 = vector.broadcast %455 : vector<1x16xf32> to vector<2x16xf32>
    %460 = arith.addf %458, %459 : vector<2x16xf32>
    %cst_76 = arith.constant 0.000000e+00 : f32
    %461 = vector.broadcast %cst_76 : f32 to vector<2x16xf32>
    %462 = arith.maximumf %460, %461 : vector<2x16xf32>
    %cst_77 = arith.constant dense<0.000000e+00> : vector<2x1xf32>
    %463 = tpu.matmul %462, %456, %cst_77 {dimension_numbers = #tpu.dot_dimension_numbers<[1], [0], [0], [1], [0, 0, 1, 1], [], []>} : vector<2x16xf32>, vector<16x1xf32>, vector<2x1xf32> -> vector<2x1xf32>
    %464 = vector.broadcast %457 : vector<1x1xf32> to vector<2x1xf32>
    %465 = arith.addf %463, %464 : vector<2x1xf32>
    %466 = arith.negf %465 : vector<2x1xf32>
    %467 = math.exp %466 : vector<2x1xf32>
    %cst_78 = arith.constant 1.000000e+00 : f32
    %468 = vector.broadcast %cst_78 : f32 to vector<2x1xf32>
    %469 = arith.addf %468, %467 : vector<2x1xf32>
    %470 = arith.divf %468, %469 : vector<2x1xf32>
    %c0_79 = arith.constant 0 : index
    %c0_80 = arith.constant 0 : index
    %471 = vector.load %arg3[%c0_79, %c0_80] : memref<2x1xf32, #tpu.memory_space<vmem>>, vector<2x1xf32>
    tpu.vector_store %arg3[%c0_79, %c0_80], %470 {strides = array<i32>} : memref<2x1xf32, #tpu.memory_space<vmem>>, vector<2x1xf32>,
    return
  }
}

</mosaic_0001>

<llo_original>
// kernel: tpu_custom_call.1
$region0: #{tpu_custom_call.1}
  #allocation0 [shape = 'u32[]', space=smem, size = 0x4, offset = 0x4, fixed_abs, tag = 'smem constant byte address 0x4 - core index']
  #allocation1 [shape = 'u32[144,128]{1,0:T(1,128)}', space=vmem, size = 0x12000, scoped, tag = 'internal scratch']
  %s0 = inlined_call_operand.vmem [shape: f32[32,8], index: 0, kind: input, shape index: {}]
  %s1 = inlined_call_operand.vmem [shape: f32[72,256], index: 1, kind: input, shape index: {}]
  %s2 = inlined_call_operand.vmem [shape: f32[96,16], index: 2, kind: input, shape index: {}]
  %s3 = inlined_call_operand.vmem [shape: f32[2,1], index: 3, kind: output, shape index: {}]
  %s4 = sld [smem:[#allocation0]]
  $region22: #{tpu_custom_call.1} parent=0
    _
  %s6 = ssub.s32 1, %s4
  %s7 = scalar_select 0, %s6, %s4
  // Predicated region
  $region2: #{tpu_custom_call.1} parent=0 // pred_check
    _
  $region3: #{tpu_custom_call.1} parent=0 // pred_check_branch
    %9 = sbr.rel (0) target = $region5
  $region4: #{tpu_custom_call.1} parent=0 // pred_region
    _
  $region5: #{tpu_custom_call.1} parent=0 // pred_fallthru
    _
  // Predicated region
  $region6: #{tpu_custom_call.1} parent=0 // pred_check
    _
  $region7: #{tpu_custom_call.1} parent=0 // pred_check_branch
    %11 = sbr.rel (0) target = $region9
  $region8: #{tpu_custom_call.1} parent=0 // pred_region
    _
  $region9: #{tpu_custom_call.1} parent=0 // pred_fallthru
    _
  // Predicated region
  $region10: #{tpu_custom_call.1} parent=0 // pred_check
    _
  $region11: #{tpu_custom_call.1} parent=0 // pred_check_branch
    %13 = sbr.rel (0) target = $region13
  $region12: #{tpu_custom_call.1} parent=0 // pred_region
    _
  $region13: #{tpu_custom_call.1} parent=0 // pred_fallthru
    _
  %v14 = vld [vmem:[%s1] sm:$0xff]
  %v15 = vld [vmem:[%s1 + $0x8] sm:$0xff]
  %v16 = vld [vmem:[%s1 + $0x10] sm:$0xff]
  %v17 = vld [vmem:[%s1 + $0x18] sm:$0xff]
  %v18 = vld [vmem:[%s1 + $0x20] sm:$0xff]
  %v19 = vld [vmem:[%s1 + $0x28] sm:$0xff]
  %v20 = vld [vmem:[%s1 + $0x30] sm:$0xff]
  %v21 = vld [vmem:[%s1 + $0x38] sm:$0xff]
  %v22 = vld [vmem:[%s1 + $0x40] sm:$0xff]
  %v23 = vld [vmem:[%s1 + $0x48] sm:$0xff]
  %v24 = vld [vmem:[%s1 + $0x50] sm:$0xff]
  %v25 = vld [vmem:[%s1 + $0x58] sm:$0xff]
  %v26 = vld [vmem:[%s1 + $0x60] sm:$0xff]
  %v27 = vld [vmem:[%s1 + $0x68] sm:$0xff]
  %v28 = vld [vmem:[%s1 + $0x70] sm:$0xff]
  %v29 = vld [vmem:[%s1 + $0x78] sm:$0xff]
  %v30 = vld [vmem:[%s1 + $0x80] sm:$0xff]
  %v31 = vld [vmem:[%s1 + $0x88] sm:$0xff]
  %v32 = vld [vmem:[%s0] sm:$0xff]
  %v33 = vld [vmem:[%s0 + $0x8] sm:$0xff]
  %v34 = vld [vmem:[%s0 + $0x10] sm:$0xff]
  %v35 = vld [vmem:[%s0 + $0x18] sm:$0xff]
  %vm36 = vcmask 64512
  %v38 = vsel %vm36, %v32, 0
  %v41 = vsel %vm36, %v33, 0
  %v44 = vsel %vm36, %v34, 0
  %v47 = vsel %vm36, %v35, 0
  %49 = vmatprep.subr.mxu0 %v15
  %50 = vmatpush1.msra.mxu0 %v14
  %51 = vmatprep.subr.mxu0 0.0
  %52 = vmatpush1.msra.mxu0 0.0
  %53 = vmatprep.subr.mxu0 0.0
  %54 = vmatpush1.msra.mxu0 0.0
  %55 = vmatprep.subr.mxu0 0.0
  %56 = vmatpush1.msra.mxu0 0.0
  %57 = vmatprep.subr.mxu0 0.0
  %58 = vmatpush1.msra.mxu0 0.0
  %59 = vmatprep.subr.mxu0 0.0
  %60 = vmatpush1.msra.mxu0 0.0
  %61 = vmatprep.subr.mxu0 0.0
  %62 = vmatpush1.msra.mxu0 0.0
  %63 = vmatprep.subr.mxu0 0.0
  %64 = vmatpush1.msra.mxu0 0.0
  %65 = vmatprep.subr.mxu0 0.0
  %66 = vmatpush1.msra.mxu0 0.0
  %67 = vmatprep.subr.mxu0 0.0
  %68 = vmatpush1.msra.mxu0 0.0
  %69 = vmatprep.subr.mxu0 0.0
  %70 = vmatpush1.msra.mxu0 0.0
  %71 = vmatprep.subr.mxu0 0.0
  %72 = vmatpush1.msra.mxu0 0.0
  %73 = vmatprep.subr.mxu0 0.0
  %74 = vmatpush1.msra.mxu0 0.0
  %75 = vmatprep.subr.mxu0 0.0
  %76 = vmatpush1.msra.mxu0 0.0
  %77 = vmatprep.subr.mxu0 0.0
  %78 = vmatpush1.msra.mxu0 0.0
  %79 = vmatprep.subr.mxu0 0.0
  %80 = vmatpush1.msra.mxu0 0.0
  %81 = vmatprep.subr.mxu0 0.0
  %82 = vmatpush1.msra.mxu0 0.0
  %83 = vmatprep.subr.mxu0 0.0
  %84 = vmatpush1.msra.mxu0 0.0
  %85 = vmatprep.subr.mxu0 0.0
  %86 = vmatpush1.msra.mxu0 0.0
  %87 = vmatprep.subr.mxu0 0.0
  %88 = vmatpush1.msra.mxu0 0.0
  %89 = vmatprep.subr.mxu0 0.0
  %90 = vmatpush1.msra.mxu0 0.0
  %91 = vmatprep.subr.mxu0 0.0
  %92 = vmatpush1.msra.mxu0 0.0
  %93 = vmatprep.subr.mxu0 0.0
  %94 = vmatpush1.msra.mxu0 0.0
  %95 = vmatprep.subr.mxu0 0.0
  %96 = vmatpush1.msra.mxu0 0.0
  %97 = vmatprep.subr.mxu0 0.0
  %98 = vmatpush1.msra.mxu0 0.0
  %99 = vmatprep.subr.mxu0 0.0
  %100 = vmatpush1.msra.mxu0 0.0
  %101 = vmatprep.subr.mxu0 0.0
  %102 = vmatpush1.msra.mxu0 0.0
  %103 = vmatprep.subr.mxu0 0.0
  %104 = vmatpush1.msra.mxu0 0.0
  %105 = vmatprep.subr.mxu0 0.0
  %106 = vmatpush1.msra.mxu0 0.0
  %107 = vmatprep.subr.mxu0 0.0
  %108 = vmatpush1.msra.mxu0 0.0
  %109 = vmatprep.subr.mxu0 0.0
  %110 = vmatpush1.msra.mxu0 0.0
  %111 = vmatprep.subr.mxu0 0.0
  %112 = vmatpush1.msra.mxu0 0.0
  %113 = vmatprep.mubr.f32.mxu0 0.0
  %114 = vmatmul.mubr.f32.gmra.mrb[0].mxu0 %v38
  %v115 = vpop.f32.mrb[0].mxu0
  %v116 = vadd.f32 0.0, %v115
  %v117 = vpop.f32.mrb[0].mxu0
  %v118 = vadd.f32 0.0, %v117
  %119 = vmatprep.mubr.f32.mxu0 0.0
  %120 = vmatmul.mubr.f32.gmra.mrb[0].mxu0 %v41
  %v121 = vpop.f32.mrb[0].mxu0
  %v122 = vadd.f32 0.0, %v121
  %v123 = vpop.f32.mrb[0].mxu0
  %v124 = vadd.f32 0.0, %v123
  %125 = vmatprep.mubr.f32.mxu0 0.0
  %126 = vmatmul.mubr.f32.gmra.mrb[0].mxu0 %v44
  %v127 = vpop.f32.mrb[0].mxu0
  %v128 = vadd.f32 0.0, %v127
  %v129 = vpop.f32.mrb[0].mxu0
  %v130 = vadd.f32 0.0, %v129
  %131 = vmatprep.mubr.f32.mxu0 0.0
  %132 = vmatmul.mubr.f32.gmra.mrb[0].mxu0 %v47
  %v133 = vpop.f32.mrb[0].mxu0
  %v134 = vadd.f32 0.0, %v133
  %v135 = vpop.f32.mrb[0].mxu0
  %v136 = vadd.f32 0.0, %v135
  %137 = vdwg.mxu0
  %vm138 = vcmask 523264
  %v140 = vsel %vm138, 0.0, 0
  %142 = vmatprep.subr.mxu0 %v17
  %143 = vmatpush1.msra.mxu0 %v16
  %144 = vmatprep.subr.mxu0 %v19
  %145 = vmatpush1.msra.mxu0 %v18
  %146 = vmatprep.subr.mxu0 %v21
  %147 = vmatpush1.msra.mxu0 %v20
  %148 = vmatprep.subr.mxu0 %v23
  %149 = vmatpush1.msra.mxu0 %v22
  %150 = vmatprep.subr.mxu0 %v25
  %151 = vmatpush1.msra.mxu0 %v24
  %152 = vmatprep.subr.mxu0 %v27
  %153 = vmatpush1.msra.mxu0 %v26
  %154 = vmatprep.subr.mxu0 %v29
  %155 = vmatpush1.msra.mxu0 %v28
  %156 = vmatprep.subr.mxu0 %v31
  %157 = vmatpush1.msra.mxu0 %v30
  %158 = vmatprep.subr.mxu0 0.0
  %159 = vmatpush1.msra.mxu0 0.0
  %160 = vmatprep.subr.mxu0 0.0
  %161 = vmatpush1.msra.mxu0 0.0
  %162 = vmatprep.subr.mxu0 0.0
  %163 = vmatpush1.msra.mxu0 0.0
  %164 = vmatprep.subr.mxu0 0.0
  %165 = vmatpush1.msra.mxu0 0.0
  %166 = vmatprep.subr.mxu0 0.0
  %167 = vmatpush1.msra.mxu0 0.0
  %168 = vmatprep.subr.mxu0 0.0
  %169 = vmatpush1.msra.mxu0 0.0
  %170 = vmatprep.subr.mxu0 0.0
  %171 = vmatpush1.msra.mxu0 0.0
  %172 = vmatprep.subr.mxu0 0.0
  %173 = vmatpush1.msra.mxu0 0.0
  %174 = vmatprep.subr.mxu0 0.0
  %175 = vmatpush1.msra.mxu0 0.0
  %176 = vmatprep.subr.mxu0 0.0
  %177 = vmatpush1.msra.mxu0 0.0
  %178 = vmatprep.subr.mxu0 0.0
  %179 = vmatpush1.msra.mxu0 0.0
  %180 = vmatprep.subr.mxu0 0.0
  %181 = vmatpush1.msra.mxu0 0.0
  %182 = vmatprep.subr.mxu0 0.0
  %183 = vmatpush1.msra.mxu0 0.0
  %184 = vmatprep.subr.mxu0 0.0
  %185 = vmatpush1.msra.mxu0 0.0
  %186 = vmatprep.subr.mxu0 0.0
  %187 = vmatpush1.msra.mxu0 0.0
  %188 = vmatprep.subr.mxu0 0.0
  %189 = vmatpush1.msra.mxu0 0.0
  %190 = vmatprep.subr.mxu0 0.0
  %191 = vmatpush1.msra.mxu0 0.0
  %192 = vmatprep.subr.mxu0 0.0
  %193 = vmatpush1.msra.mxu0 0.0
  %194 = vmatprep.subr.mxu0 0.0
  %195 = vmatpush1.msra.mxu0 0.0
  %196 = vmatprep.subr.mxu0 0.0
  %197 = vmatpush1.msra.mxu0 0.0
  %198 = vmatprep.subr.mxu0 0.0
  %199 = vmatpush1.msra.mxu0 0.0
  %200 = vmatprep.subr.mxu0 0.0
  %201 = vmatpush1.msra.mxu0 0.0
  %202 = vmatprep.subr.mxu0 0.0
  %203 = vmatpush1.msra.mxu0 0.0
  %204 = vmatprep.subr.mxu0 0.0
  %205 = vmatpush1.msra.mxu0 0.0
  %206 = vmatprep.mubr.f32.mxu0 0.0
  %207 = vmatmul.mubr.f32.gmra.mrb[0].mxu0 %v140
  %v208 = vpop.f32.mrb[0].mxu0
  %v209 = vadd.f32 0.0, %v208
  %v210 = vpop.f32.mrb[0].mxu0
  %v211 = vadd.f32 0.0, %v210
  %212 = vdwg.mxu0
  %v213 = vadd.f32 %v116, %v209
  %v214 = vadd.f32 %v118, %v211
  %v215 = vxor.u32 %v213, 2147483648
  %v216 = vmul.f32 %v215, 1.442695
  %v217 = vpow.pop %v216
  %v218 = vadd.f32 %v217, 1.0
  %v219 = vrcp.pop %v218
  %v220 = vmul.f32 1.0, %v219
  %v221 = vtanh.pop %v214
  %v222 = vxor.u32 %v214, 2147483648
  %v223 = vmul.f32 %v222, 1.442695
  %v224 = vpow.pop %v223
  %v225 = vadd.f32 %v224, 1.0
  %v226 = vrcp.pop %v225
  %v227 = vmul.f32 1.0, %v226
  %v228 = vmul.f32 %v220, 0.0
  %v229 = vmul.f32 %v220, %v221
  %231 = vrot.lane.b32.xlu0 %v229, 64
  %v232 = vpop.permute.xlu0 %231
  %v234 = vadd.f32 %v228, %v232
  %v235 = vtanh.pop %v234
  %v236 = vmul.f32 %v227, %v235
  %238 = vrot.lane.b32.xlu0 %v236, 64
  %v239 = vpop.permute.xlu0 %238
  %v240 = vsel %vm138, %v239, 0
  %242 = vmatprep.subr.mxu0 %v17
  %243 = vmatpush1.msra.mxu0 %v16
  %244 = vmatprep.subr.mxu0 %v19
  %245 = vmatpush1.msra.mxu0 %v18
  %246 = vmatprep.subr.mxu0 %v21
  %247 = vmatpush1.msra.mxu0 %v20
  %248 = vmatprep.subr.mxu0 %v23
  %249 = vmatpush1.msra.mxu0 %v22
  %250 = vmatprep.subr.mxu0 %v25
  %251 = vmatpush1.msra.mxu0 %v24
  %252 = vmatprep.subr.mxu0 %v27
  %253 = vmatpush1.msra.mxu0 %v26
  %254 = vmatprep.subr.mxu0 %v29
  %255 = vmatpush1.msra.mxu0 %v28
  %256 = vmatprep.subr.mxu0 %v31
  %257 = vmatpush1.msra.mxu0 %v30
  %258 = vmatprep.subr.mxu0 0.0
  %259 = vmatpush1.msra.mxu0 0.0
  %260 = vmatprep.subr.mxu0 0.0
  %261 = vmatpush1.msra.mxu0 0.0
  %262 = vmatprep.subr.mxu0 0.0
  %263 = vmatpush1.msra.mxu0 0.0
  %264 = vmatprep.subr.mxu0 0.0
  %265 = vmatpush1.msra.mxu0 0.0
  %266 = vmatprep.subr.mxu0 0.0
  %267 = vmatpush1.msra.mxu0 0.0
  %268 = vmatprep.subr.mxu0 0.0
  %269 = vmatpush1.msra.mxu0 0.0
  %270 = vmatprep.subr.mxu0 0.0
  %271 = vmatpush1.msra.mxu0 0.0
  %272 = vmatprep.subr.mxu0 0.0
  %273 = vmatpush1.msra.mxu0 0.0
  %274 = vmatprep.subr.mxu0 0.0
  %275 = vmatpush1.msra.mxu0 0.0
  %276 = vmatprep.subr.mxu0 0.0
  %277 = vmatpush1.msra.mxu0 0.0
  %278 = vmatprep.subr.mxu0 0.0
  %279 = vmatpush1.msra.mxu0 0.0
  %280 = vmatprep.subr.mxu0 0.0
  %281 = vmatpush1.msra.mxu0 0.0
  %282 = vmatprep.subr.mxu0 0.0
  %283 = vmatpush1.msra.mxu0 0.0
  %284 = vmatprep.subr.mxu0 0.0
  %285 = vmatpush1.msra.mxu0 0.0
  %286 = vmatprep.subr.mxu0 0.0
  %287 = vmatpush1.msra.mxu0 0.0
  %288 = vmatprep.subr.mxu0 0.0
  %289 = vmatpush1.msra.mxu0 0.0
  %290 = vmatprep.subr.mxu0 0.0
  %291 = vmatpush1.msra.mxu0 0.0
  %292 = vmatprep.subr.mxu0 0.0
  %293 = vmatpush1.msra.mxu0 0.0
  %294 = vmatprep.subr.mxu0 0.0
  %295 = vmatpush1.msra.mxu0 0.0
  %296 = vmatprep.subr.mxu0 0.0
  %297 = vmatpush1.msra.mxu0 0.0
  %298 = vmatprep.subr.mxu0 0.0
  %299 = vmatpush1.msra.mxu0 0.0
  %300 = vmatprep.subr.mxu0 0.0
  %301 = vmatpush1.msra.mxu0 0.0
  %302 = vmatprep.subr.mxu0 0.0
  %303 = vmatpush1.msra.mxu0 0.0
  %304 = vmatprep.subr.mxu0 0.0
  %305 = vmatpush1.msra.mxu0 0.0
  %306 = vmatprep.mubr.f32.mxu0 0.0
  %307 = vmatmul.mubr.f32.gmra.mrb[0].mxu0 %v240
  %v308 = vpop.f32.mrb[0].mxu0
  %v309 = vadd.f32 0.0, %v308
  %v310 = vpop.f32.mrb[0].mxu0
  %v311 = vadd.f32 0.0, %v310
  %312 = vdwg.mxu0
  %v315 = vrot.slane %v309, 6
  %v316 = vrot.slane %v311, 6
  %v319 = vadd.f32 %v116, %v315
  %v320 = vadd.f32 %v118, %v316
  %v321 = vxor.u32 %v319, 2147483648
  %v322 = vmul.f32 %v321, 1.442695
  %v323 = vpow.pop %v322
  %v324 = vadd.f32 %v323, 1.0
  %v325 = vrcp.pop %v324
  %v326 = vmul.f32 1.0, %v325
  %v327 = vtanh.pop %v320
  %v328 = vxor.u32 %v320, 2147483648
  %v329 = vmul.f32 %v328, 1.442695
  %v330 = vpow.pop %v329
  %v331 = vadd.f32 %v330, 1.0
  %v332 = vrcp.pop %v331
  %v333 = vmul.f32 1.0, %v332
  %v335 = vrot.slane %v234, 6
  %v337 = vmul.f32 %v326, %v335
  %v338 = vmul.f32 %v326, %v327
  %340 = vrot.lane.b32.xlu0 %v338, 64
  %v341 = vpop.permute.xlu0 %340
  %v343 = vadd.f32 %v337, %v341
  %v344 = vtanh.pop %v343
  %v345 = vmul.f32 %v333, %v344
  %v347 = vrot.slane %v345, 2
  %348 = vrot.lane.b32.xlu0 %v347, 64
  %v349 = vpop.permute.xlu0 %348
  %v350 = vsel %vm138, %v349, 0
  %352 = vmatprep.subr.mxu0 %v17
  %353 = vmatpush1.msra.mxu0 %v16
  %354 = vmatprep.subr.mxu0 %v19
  %355 = vmatpush1.msra.mxu0 %v18
  %356 = vmatprep.subr.mxu0 %v21
  %357 = vmatpush1.msra.mxu0 %v20
  %358 = vmatprep.subr.mxu0 %v23
  %359 = vmatpush1.msra.mxu0 %v22
  %360 = vmatprep.subr.mxu0 %v25
  %361 = vmatpush1.msra.mxu0 %v24
  %362 = vmatprep.subr.mxu0 %v27
  %363 = vmatpush1.msra.mxu0 %v26
  %364 = vmatprep.subr.mxu0 %v29
  %365 = vmatpush1.msra.mxu0 %v28
  %366 = vmatprep.subr.mxu0 %v31
  %367 = vmatpush1.msra.mxu0 %v30
  %368 = vmatprep.subr.mxu0 0.0
  %369 = vmatpush1.msra.mxu0 0.0
  %370 = vmatprep.subr.mxu0 0.0
  %371 = vmatpush1.msra.mxu0 0.0
  %372 = vmatprep.subr.mxu0 0.0
  %373 = vmatpush1.msra.mxu0 0.0
  %374 = vmatprep.subr.mxu0 0.0
  %375 = vmatpush1.msra.mxu0 0.0
  %376 = vmatprep.subr.mxu0 0.0
  %377 = vmatpush1.msra.mxu0 0.0
  %378 = vmatprep.subr.mxu0 0.0
  %379 = vmatpush1.msra.mxu0 0.0
  %380 = vmatprep.subr.mxu0 0.0
  %381 = vmatpush1.msra.mxu0 0.0
  %382 = vmatprep.subr.mxu0 0.0
  %383 = vmatpush1.msra.mxu0 0.0
  %384 = vmatprep.subr.mxu0 0.0
  %385 = vmatpush1.msra.mxu0 0.0
  %386 = vmatprep.subr.mxu0 0.0
  %387 = vmatpush1.msra.mxu0 0.0
  %388 = vmatprep.subr.mxu0 0.0
  %389 = vmatpush1.msra.mxu0 0.0
  %390 = vmatprep.subr.mxu0 0.0
  %391 = vmatpush1.msra.mxu0 0.0
  %392 = vmatprep.subr.mxu0 0.0
  %393 = vmatpush1.msra.mxu0 0.0
  %394 = vmatprep.subr.mxu0 0.0
  %395 = vmatpush1.msra.mxu0 0.0
  %396 = vmatprep.subr.mxu0 0.0
  %397 = vmatpush1.msra.mxu0 0.0
  %398 = vmatprep.subr.mxu0 0.0
  %399 = vmatpush1.msra.mxu0 0.0
  %400 = vmatprep.subr.mxu0 0.0
  %401 = vmatpush1.msra.mxu0 0.0
  %402 = vmatprep.subr.mxu0 0.0
  %403 = vmatpush1.msra.mxu0 0.0
  %404 = vmatprep.subr.mxu0 0.0
  %405 = vmatpush1.msra.mxu0 0.0
  %406 = vmatprep.subr.mxu0 0.0
  %407 = vmatpush1.msra.mxu0 0.0
  %408 = vmatprep.subr.mxu0 0.0
  %409 = vmatpush1.msra.mxu0 0.0
  %410 = vmatprep.subr.mxu0 0.0
  %411 = vmatpush1.msra.mxu0 0.0
  %412 = vmatprep.subr.mxu0 0.0
  %413 = vmatpush1.msra.mxu0 0.0
  %414 = vmatprep.subr.mxu0 0.0
  %415 = vmatpush1.msra.mxu0 0.0
  %416 = vmatprep.mubr.f32.mxu0 0.0
  %417 = vmatmul.mubr.f32.gmra.mrb[0].mxu0 %v350
  %v418 = vpop.f32.mrb[0].mxu0
  %v419 = vadd.f32 0.0, %v418
  %v420 = vpop.f32.mrb[0].mxu0
  %v421 = vadd.f32 0.0, %v420
  %422 = vdwg.mxu0
  %v425 = vrot.slane %v419, 4
  %v426 = vrot.slane %v421, 4
  %v429 = vadd.f32 %v116, %v425
  %v430 = vadd.f32 %v118, %v426
  %v431 = vxor.u32 %v429, 2147483648
  %v432 = vmul.f32 %v431, 1.442695
  %v433 = vpow.pop %v432
  %v434 = vadd.f32 %v433, 1.0
  %v435 = vrcp.pop %v434
  %v436 = vmul.f32 1.0, %v435
  %v437 = vtanh.pop %v430
  %v438 = vxor.u32 %v430, 2147483648
  %v439 = vmul.f32 %v438, 1.442695
  %v440 = vpow.pop %v439
  %v441 = vadd.f32 %v440, 1.0
  %v442 = vrcp.pop %v441
  %v443 = vmul.f32 1.0, %v442
  %v445 = vrot.slane %v343, 6
  %v447 = vmul.f32 %v436, %v445
  %v448 = vmul.f32 %v436, %v437
  %450 = vrot.lane.b32.xlu0 %v448, 64
  %v451 = vpop.permute.xlu0 %450
  %v453 = vadd.f32 %v447, %v451
  %v454 = vtanh.pop %v453
  %v455 = vmul.f32 %v443, %v454
  %v457 = vrot.slane %v455, 4
  %458 = vrot.lane.b32.xlu0 %v457, 64
  %v459 = vpop.permute.xlu0 %458
  %v460 = vsel %vm138, %v459, 0
  %462 = vmatprep.subr.mxu0 %v17
  %463 = vmatpush1.msra.mxu0 %v16
  %464 = vmatprep.subr.mxu0 %v19
  %465 = vmatpush1.msra.mxu0 %v18
  %466 = vmatprep.subr.mxu0 %v21
  %467 = vmatpush1.msra.mxu0 %v20
  %468 = vmatprep.subr.mxu0 %v23
  %469 = vmatpush1.msra.mxu0 %v22
  %470 = vmatprep.subr.mxu0 %v25
  %471 = vmatpush1.msra.mxu0 %v24
  %472 = vmatprep.subr.mxu0 %v27
  %473 = vmatpush1.msra.mxu0 %v26
  %474 = vmatprep.subr.mxu0 %v29
  %475 = vmatpush1.msra.mxu0 %v28
  %476 = vmatprep.subr.mxu0 %v31
  %477 = vmatpush1.msra.mxu0 %v30
  %478 = vmatprep.subr.mxu0 0.0
  %479 = vmatpush1.msra.mxu0 0.0
  %480 = vmatprep.subr.mxu0 0.0
  %481 = vmatpush1.msra.mxu0 0.0
  %482 = vmatprep.subr.mxu0 0.0
  %483 = vmatpush1.msra.mxu0 0.0
  %484 = vmatprep.subr.mxu0 0.0
  %485 = vmatpush1.msra.mxu0 0.0
  %486 = vmatprep.subr.mxu0 0.0
  %487 = vmatpush1.msra.mxu0 0.0
  %488 = vmatprep.subr.mxu0 0.0
  %489 = vmatpush1.msra.mxu0 0.0
  %490 = vmatprep.subr.mxu0 0.0
  %491 = vmatpush1.msra.mxu0 0.0
  %492 = vmatprep.subr.mxu0 0.0
  %493 = vmatpush1.msra.mxu0 0.0
  %494 = vmatprep.subr.mxu0 0.0
  %495 = vmatpush1.msra.mxu0 0.0
  %496 = vmatprep.subr.mxu0 0.0
  %497 = vmatpush1.msra.mxu0 0.0
  %498 = vmatprep.subr.mxu0 0.0
  %499 = vmatpush1.msra.mxu0 0.0
  %500 = vmatprep.subr.mxu0 0.0
  %501 = vmatpush1.msra.mxu0 0.0
  %502 = vmatprep.subr.mxu0 0.0
  %503 = vmatpush1.msra.mxu0 0.0
  %504 = vmatprep.subr.mxu0 0.0
  %505 = vmatpush1.msra.mxu0 0.0
  %506 = vmatprep.subr.mxu0 0.0
  %507 = vmatpush1.msra.mxu0 0.0
  %508 = vmatprep.subr.mxu0 0.0
  %509 = vmatpush1.msra.mxu0 0.0
  %510 = vmatprep.subr.mxu0 0.0
  %511 = vmatpush1.msra.mxu0 0.0
  %512 = vmatprep.subr.mxu0 0.0
  %513 = vmatpush1.msra.mxu0 0.0
  %514 = vmatprep.subr.mxu0 0.0
  %515 = vmatpush1.msra.mxu0 0.0
  %516 = vmatprep.subr.mxu0 0.0
  %517 = vmatpush1.msra.mxu0 0.0
  %518 = vmatprep.subr.mxu0 0.0
  %519 = vmatpush1.msra.mxu0 0.0
  %520 = vmatprep.subr.mxu0 0.0
  %521 = vmatpush1.msra.mxu0 0.0
  %522 = vmatprep.subr.mxu0 0.0
  %523 = vmatpush1.msra.mxu0 0.0
  %524 = vmatprep.subr.mxu0 0.0
  %525 = vmatpush1.msra.mxu0 0.0
  %526 = vmatprep.mubr.f32.mxu0 0.0
  %527 = vmatmul.mubr.f32.gmra.mrb[0].mxu0 %v460
  %v528 = vpop.f32.mrb[0].mxu0
  %v529 = vadd.f32 0.0, %v528
  %v530 = vpop.f32.mrb[0].mxu0
  %v531 = vadd.f32 0.0, %v530
  %532 = vdwg.mxu0
  %v535 = vrot.slane %v529, 2
  %v536 = vrot.slane %v531, 2
  %v539 = vadd.f32 %v116, %v535
  %v540 = vadd.f32 %v118, %v536
  %v541 = vxor.u32 %v539, 2147483648
  %v542 = vmul.f32 %v541, 1.442695
  %v543 = vpow.pop %v542
  %v544 = vadd.f32 %v543, 1.0
  %v545 = vrcp.pop %v544
  %v546 = vmul.f32 1.0, %v545
  %v547 = vtanh.pop %v540
  %v548 = vxor.u32 %v540, 2147483648
  %v549 = vmul.f32 %v548, 1.442695
  %v550 = vpow.pop %v549
  %v551 = vadd.f32 %v550, 1.0
  %v552 = vrcp.pop %v551
  %v553 = vmul.f32 1.0, %v552
  %v555 = vrot.slane %v453, 6
  %v557 = vmul.f32 %v546, %v555
  %v558 = vmul.f32 %v546, %v547
  %560 = vrot.lane.b32.xlu0 %v558, 64
  %v561 = vpop.permute.xlu0 %560
  %v563 = vadd.f32 %v557, %v561
  %v564 = vtanh.pop %v563
  %v565 = vmul.f32 %v553, %v564
  %v567 = vrot.slane %v565, 6
  %568 = vrot.lane.b32.xlu0 %v567, 64
  %v569 = vpop.permute.xlu0 %568
  %v570 = vsel %vm138, %v569, 0
  %572 = vmatprep.subr.mxu0 %v17
  %573 = vmatpush1.msra.mxu0 %v16
  %574 = vmatprep.subr.mxu0 %v19
  %575 = vmatpush1.msra.mxu0 %v18
  %576 = vmatprep.subr.mxu0 %v21
  %577 = vmatpush1.msra.mxu0 %v20
  %578 = vmatprep.subr.mxu0 %v23
  %579 = vmatpush1.msra.mxu0 %v22
  %580 = vmatprep.subr.mxu0 %v25
  %581 = vmatpush1.msra.mxu0 %v24
  %582 = vmatprep.subr.mxu0 %v27
  %583 = vmatpush1.msra.mxu0 %v26
  %584 = vmatprep.subr.mxu0 %v29
  %585 = vmatpush1.msra.mxu0 %v28
  %586 = vmatprep.subr.mxu0 %v31
  %587 = vmatpush1.msra.mxu0 %v30
  %588 = vmatprep.subr.mxu0 0.0
  %589 = vmatpush1.msra.mxu0 0.0
  %590 = vmatprep.subr.mxu0 0.0
  %591 = vmatpush1.msra.mxu0 0.0
  %592 = vmatprep.subr.mxu0 0.0
  %593 = vmatpush1.msra.mxu0 0.0
  %594 = vmatprep.subr.mxu0 0.0
  %595 = vmatpush1.msra.mxu0 0.0
  %596 = vmatprep.subr.mxu0 0.0
  %597 = vmatpush1.msra.mxu0 0.0
  %598 = vmatprep.subr.mxu0 0.0
  %599 = vmatpush1.msra.mxu0 0.0
  %600 = vmatprep.subr.mxu0 0.0
  %601 = vmatpush1.msra.mxu0 0.0
  %602 = vmatprep.subr.mxu0 0.0
  %603 = vmatpush1.msra.mxu0 0.0
  %604 = vmatprep.subr.mxu0 0.0
  %605 = vmatpush1.msra.mxu0 0.0
  %606 = vmatprep.subr.mxu0 0.0
  %607 = vmatpush1.msra.mxu0 0.0
  %608 = vmatprep.subr.mxu0 0.0
  %609 = vmatpush1.msra.mxu0 0.0
  %610 = vmatprep.subr.mxu0 0.0
  %611 = vmatpush1.msra.mxu0 0.0
  %612 = vmatprep.subr.mxu0 0.0
  %613 = vmatpush1.msra.mxu0 0.0
  %614 = vmatprep.subr.mxu0 0.0
  %615 = vmatpush1.msra.mxu0 0.0
  %616 = vmatprep.subr.mxu0 0.0
  %617 = vmatpush1.msra.mxu0 0.0
  %618 = vmatprep.subr.mxu0 0.0
  %619 = vmatpush1.msra.mxu0 0.0
  %620 = vmatprep.subr.mxu0 0.0
  %621 = vmatpush1.msra.mxu0 0.0
  %622 = vmatprep.subr.mxu0 0.0
  %623 = vmatpush1.msra.mxu0 0.0
  %624 = vmatprep.subr.mxu0 0.0
  %625 = vmatpush1.msra.mxu0 0.0
  %626 = vmatprep.subr.mxu0 0.0
  %627 = vmatpush1.msra.mxu0 0.0
  %628 = vmatprep.subr.mxu0 0.0
  %629 = vmatpush1.msra.mxu0 0.0
  %630 = vmatprep.subr.mxu0 0.0
  %631 = vmatpush1.msra.mxu0 0.0
  %632 = vmatprep.subr.mxu0 0.0
  %633 = vmatpush1.msra.mxu0 0.0
  %634 = vmatprep.subr.mxu0 0.0
  %635 = vmatpush1.msra.mxu0 0.0
  %636 = vmatprep.mubr.f32.mxu0 0.0
  %637 = vmatmul.mubr.f32.gmra.mrb[0].mxu0 %v570
  %v638 = vpop.f32.mrb[0].mxu0
  %v639 = vadd.f32 0.0, %v638
  %v640 = vpop.f32.mrb[0].mxu0
  %v641 = vadd.f32 0.0, %v640
  %642 = vdwg.mxu0
  %v643 = vadd.f32 %v122, %v639
  %v644 = vadd.f32 %v124, %v641
  %v645 = vxor.u32 %v643, 2147483648
  %v646 = vmul.f32 %v645, 1.442695
  %v647 = vpow.pop %v646
  %v648 = vadd.f32 %v647, 1.0
  %v649 = vrcp.pop %v648
  %v650 = vmul.f32 1.0, %v649
  %v651 = vtanh.pop %v644
  %v652 = vxor.u32 %v644, 2147483648
  %v653 = vmul.f32 %v652, 1.442695
  %v654 = vpow.pop %v653
  %v655 = vadd.f32 %v654, 1.0
  %v656 = vrcp.pop %v655
  %v657 = vmul.f32 1.0, %v656
  %v659 = vrot.slane %v563, 6
  %v661 = vmul.f32 %v650, %v659
  %v662 = vmul.f32 %v650, %v651
  %664 = vrot.lane.b32.xlu0 %v662, 64
  %v665 = vpop.permute.xlu0 %664
  %v667 = vadd.f32 %v661, %v665
  %v668 = vtanh.pop %v667
  %v669 = vmul.f32 %v657, %v668
  %671 = vrot.lane.b32.xlu0 %v669, 64
  %v672 = vpop.permute.xlu0 %671
  %v673 = vsel %vm138, %v672, 0
  %675 = vmatprep.subr.mxu0 %v17
  %676 = vmatpush1.msra.mxu0 %v16
  %677 = vmatprep.subr.mxu0 %v19
  %678 = vmatpush1.msra.mxu0 %v18
  %679 = vmatprep.subr.mxu0 %v21
  %680 = vmatpush1.msra.mxu0 %v20
  %681 = vmatprep.subr.mxu0 %v23
  %682 = vmatpush1.msra.mxu0 %v22
  %683 = vmatprep.subr.mxu0 %v25
  %684 = vmatpush1.msra.mxu0 %v24
  %685 = vmatprep.subr.mxu0 %v27
  %686 = vmatpush1.msra.mxu0 %v26
  %687 = vmatprep.subr.mxu0 %v29
  %688 = vmatpush1.msra.mxu0 %v28
  %689 = vmatprep.subr.mxu0 %v31
  %690 = vmatpush1.msra.mxu0 %v30
  %691 = vmatprep.subr.mxu0 0.0
  %692 = vmatpush1.msra.mxu0 0.0
  %693 = vmatprep.subr.mxu0 0.0
  %694 = vmatpush1.msra.mxu0 0.0
  %695 = vmatprep.subr.mxu0 0.0
  %696 = vmatpush1.msra.mxu0 0.0
  %697 = vmatprep.subr.mxu0 0.0
  %698 = vmatpush1.msra.mxu0 0.0
  %699 = vmatprep.subr.mxu0 0.0
  %700 = vmatpush1.msra.mxu0 0.0
  %701 = vmatprep.subr.mxu0 0.0
  %702 = vmatpush1.msra.mxu0 0.0
  %703 = vmatprep.subr.mxu0 0.0
  %704 = vmatpush1.msra.mxu0 0.0
  %705 = vmatprep.subr.mxu0 0.0
  %706 = vmatpush1.msra.mxu0 0.0
  %707 = vmatprep.subr.mxu0 0.0
  %708 = vmatpush1.msra.mxu0 0.0
  %709 = vmatprep.subr.mxu0 0.0
  %710 = vmatpush1.msra.mxu0 0.0
  %711 = vmatprep.subr.mxu0 0.0
  %712 = vmatpush1.msra.mxu0 0.0
  %713 = vmatprep.subr.mxu0 0.0
  %714 = vmatpush1.msra.mxu0 0.0
  %715 = vmatprep.subr.mxu0 0.0
  %716 = vmatpush1.msra.mxu0 0.0
  %717 = vmatprep.subr.mxu0 0.0
  %718 = vmatpush1.msra.mxu0 0.0
  %719 = vmatprep.subr.mxu0 0.0
  %720 = vmatpush1.msra.mxu0 0.0
  %721 = vmatprep.subr.mxu0 0.0
  %722 = vmatpush1.msra.mxu0 0.0
  %723 = vmatprep.subr.mxu0 0.0
  %724 = vmatpush1.msra.mxu0 0.0
  %725 = vmatprep.subr.mxu0 0.0
  %726 = vmatpush1.msra.mxu0 0.0
  %727 = vmatprep.subr.mxu0 0.0
  %728 = vmatpush1.msra.mxu0 0.0
  %729 = vmatprep.subr.mxu0 0.0
  %730 = vmatpush1.msra.mxu0 0.0
  %731 = vmatprep.subr.mxu0 0.0
  %732 = vmatpush1.msra.mxu0 0.0
  %733 = vmatprep.subr.mxu0 0.0
  %734 = vmatpush1.msra.mxu0 0.0
  %735 = vmatprep.subr.mxu0 0.0
  %736 = vmatpush1.msra.mxu0 0.0
  %737 = vmatprep.subr.mxu0 0.0
  %738 = vmatpush1.msra.mxu0 0.0
  %739 = vmatprep.mubr.f32.mxu0 0.0
  %740 = vmatmul.mubr.f32.gmra.mrb[0].mxu0 %v673
  %v741 = vpop.f32.mrb[0].mxu0
  %v742 = vadd.f32 0.0, %v741
  %v743 = vpop.f32.mrb[0].mxu0
  %v744 = vadd.f32 0.0, %v743
  %745 = vdwg.mxu0
  %v748 = vrot.slane %v742, 6
  %v749 = vrot.slane %v744, 6
  %v752 = vadd.f32 %v122, %v748
  %v753 = vadd.f32 %v124, %v749
  %v754 = vxor.u32 %v752, 2147483648
  %v755 = vmul.f32 %v754, 1.442695
  %v756 = vpow.pop %v755
  %v757 = vadd.f32 %v756, 1.0
  %v758 = vrcp.pop %v757
  %v759 = vmul.f32 1.0, %v758
  %v760 = vtanh.pop %v753
  %v761 = vxor.u32 %v753, 2147483648
  %v762 = vmul.f32 %v761, 1.442695
  %v763 = vpow.pop %v762
  %v764 = vadd.f32 %v763, 1.0
  %v765 = vrcp.pop %v764
  %v766 = vmul.f32 1.0, %v765
  %v768 = vrot.slane %v667, 6
  %v770 = vmul.f32 %v759, %v768
  %v771 = vmul.f32 %v759, %v760
  %773 = vrot.lane.b32.xlu0 %v771, 64
  %v774 = vpop.permute.xlu0 %773
  %v776 = vadd.f32 %v770, %v774
  %v777 = vtanh.pop %v776
  %v778 = vmul.f32 %v766, %v777
  %v780 = vrot.slane %v778, 2
  %781 = vrot.lane.b32.xlu0 %v780, 64
  %v782 = vpop.permute.xlu0 %781
  %v783 = vsel %vm138, %v782, 0
  %785 = vmatprep.subr.mxu0 %v17
  %786 = vmatpush1.msra.mxu0 %v16
  %787 = vmatprep.subr.mxu0 %v19
  %788 = vmatpush1.msra.mxu0 %v18
  %789 = vmatprep.subr.mxu0 %v21
  %790 = vmatpush1.msra.mxu0 %v20
  %791 = vmatprep.subr.mxu0 %v23
  %792 = vmatpush1.msra.mxu0 %v22
  %793 = vmatprep.subr.mxu0 %v25
  %794 = vmatpush1.msra.mxu0 %v24
  %795 = vmatprep.subr.mxu0 %v27
  %796 = vmatpush1.msra.mxu0 %v26
  %797 = vmatprep.subr.mxu0 %v29
  %798 = vmatpush1.msra.mxu0 %v28
  %799 = vmatprep.subr.mxu0 %v31
  %800 = vmatpush1.msra.mxu0 %v30
  %801 = vmatprep.subr.mxu0 0.0
  %802 = vmatpush1.msra.mxu0 0.0
  %803 = vmatprep.subr.mxu0 0.0
  %804 = vmatpush1.msra.mxu0 0.0
  %805 = vmatprep.subr.mxu0 0.0
  %806 = vmatpush1.msra.mxu0 0.0
  %807 = vmatprep.subr.mxu0 0.0
  %808 = vmatpush1.msra.mxu0 0.0
  %809 = vmatprep.subr.mxu0 0.0
  %810 = vmatpush1.msra.mxu0 0.0
  %811 = vmatprep.subr.mxu0 0.0
  %812 = vmatpush1.msra.mxu0 0.0
  %813 = vmatprep.subr.mxu0 0.0
  %814 = vmatpush1.msra.mxu0 0.0
  %815 = vmatprep.subr.mxu0 0.0
  %816 = vmatpush1.msra.mxu0 0.0
  %817 = vmatprep.subr.mxu0 0.0
  %818 = vmatpush1.msra.mxu0 0.0
  %819 = vmatprep.subr.mxu0 0.0
  %820 = vmatpush1.msra.mxu0 0.0
  %821 = vmatprep.subr.mxu0 0.0
  %822 = vmatpush1.msra.mxu0 0.0
  %823 = vmatprep.subr.mxu0 0.0
  %824 = vmatpush1.msra.mxu0 0.0
  %825 = vmatprep.subr.mxu0 0.0
  %826 = vmatpush1.msra.mxu0 0.0
  %827 = vmatprep.subr.mxu0 0.0
  %828 = vmatpush1.msra.mxu0 0.0
  %829 = vmatprep.subr.mxu0 0.0
  %830 = vmatpush1.msra.mxu0 0.0
  %831 = vmatprep.subr.mxu0 0.0
  %832 = vmatpush1.msra.mxu0 0.0
  %833 = vmatprep.subr.mxu0 0.0
  %834 = vmatpush1.msra.mxu0 0.0
  %835 = vmatprep.subr.mxu0 0.0
  %836 = vmatpush1.msra.mxu0 0.0
  %837 = vmatprep.subr.mxu0 0.0
  %838 = vmatpush1.msra.mxu0 0.0
  %839 = vmatprep.subr.mxu0 0.0
  %840 = vmatpush1.msra.mxu0 0.0
  %841 = vmatprep.subr.mxu0 0.0
  %842 = vmatpush1.msra.mxu0 0.0
  %843 = vmatprep.subr.mxu0 0.0
  %844 = vmatpush1.msra.mxu0 0.0
  %845 = vmatprep.subr.mxu0 0.0
  %846 = vmatpush1.msra.mxu0 0.0
  %847 = vmatprep.subr.mxu0 0.0
  %848 = vmatpush1.msra.mxu0 0.0
  %849 = vmatprep.mubr.f32.mxu0 0.0
  %850 = vmatmul.mubr.f32.gmra.mrb[0].mxu0 %v783
  %v851 = vpop.f32.mrb[0].mxu0
  %v852 = vadd.f32 0.0, %v851
  %v853 = vpop.f32.mrb[0].mxu0
  %v854 = vadd.f32 0.0, %v853
  %855 = vdwg.mxu0
  %v858 = vrot.slane %v852, 4
  %v859 = vrot.slane %v854, 4
  %v862 = vadd.f32 %v122, %v858
  %v863 = vadd.f32 %v124, %v859
  %v864 = vxor.u32 %v862, 2147483648
  %v865 = vmul.f32 %v864, 1.442695
  %v866 = vpow.pop %v865
  %v867 = vadd.f32 %v866, 1.0
  %v868 = vrcp.pop %v867
  %v869 = vmul.f32 1.0, %v868
  %v870 = vtanh.pop %v863
  %v871 = vxor.u32 %v863, 2147483648
  %v872 = vmul.f32 %v871, 1.442695
  %v873 = vpow.pop %v872
  %v874 = vadd.f32 %v873, 1.0
  %v875 = vrcp.pop %v874
  %v876 = vmul.f32 1.0, %v875
  %v878 = vrot.slane %v776, 6
  %v880 = vmul.f32 %v869, %v878
  %v881 = vmul.f32 %v869, %v870
  %883 = vrot.lane.b32.xlu0 %v881, 64
  %v884 = vpop.permute.xlu0 %883
  %v886 = vadd.f32 %v880, %v884
  %v887 = vtanh.pop %v886
  %v888 = vmul.f32 %v876, %v887
  %v890 = vrot.slane %v888, 4
  %891 = vrot.lane.b32.xlu0 %v890, 64
  %v892 = vpop.permute.xlu0 %891
  %v893 = vsel %vm138, %v892, 0
  %895 = vmatprep.subr.mxu0 %v17
  %896 = vmatpush1.msra.mxu0 %v16
  %897 = vmatprep.subr.mxu0 %v19
  %898 = vmatpush1.msra.mxu0 %v18
  %899 = vmatprep.subr.mxu0 %v21
  %900 = vmatpush1.msra.mxu0 %v20
  %901 = vmatprep.subr.mxu0 %v23
  %902 = vmatpush1.msra.mxu0 %v22
  %903 = vmatprep.subr.mxu0 %v25
  %904 = vmatpush1.msra.mxu0 %v24
  %905 = vmatprep.subr.mxu0 %v27
  %906 = vmatpush1.msra.mxu0 %v26
  %907 = vmatprep.subr.mxu0 %v29
  %908 = vmatpush1.msra.mxu0 %v28
  %909 = vmatprep.subr.mxu0 %v31
  %910 = vmatpush1.msra.mxu0 %v30
  %911 = vmatprep.subr.mxu0 0.0
  %912 = vmatpush1.msra.mxu0 0.0
  %913 = vmatprep.subr.mxu0 0.0
  %914 = vmatpush1.msra.mxu0 0.0
  %915 = vmatprep.subr.mxu0 0.0
  %916 = vmatpush1.msra.mxu0 0.0
  %917 = vmatprep.subr.mxu0 0.0
  %918 = vmatpush1.msra.mxu0 0.0
  %919 = vmatprep.subr.mxu0 0.0
  %920 = vmatpush1.msra.mxu0 0.0
  %921 = vmatprep.subr.mxu0 0.0
  %922 = vmatpush1.msra.mxu0 0.0
  %923 = vmatprep.subr.mxu0 0.0
  %924 = vmatpush1.msra.mxu0 0.0
  %925 = vmatprep.subr.mxu0 0.0
  %926 = vmatpush1.msra.mxu0 0.0
  %927 = vmatprep.subr.mxu0 0.0
  %928 = vmatpush1.msra.mxu0 0.0
  %929 = vmatprep.subr.mxu0 0.0
  %930 = vmatpush1.msra.mxu0 0.0
  %931 = vmatprep.subr.mxu0 0.0
  %932 = vmatpush1.msra.mxu0 0.0
  %933 = vmatprep.subr.mxu0 0.0
  %934 = vmatpush1.msra.mxu0 0.0
  %935 = vmatprep.subr.mxu0 0.0
  %936 = vmatpush1.msra.mxu0 0.0
  %937 = vmatprep.subr.mxu0 0.0
  %938 = vmatpush1.msra.mxu0 0.0
  %939 = vmatprep.subr.mxu0 0.0
  %940 = vmatpush1.msra.mxu0 0.0
  %941 = vmatprep.subr.mxu0 0.0
  %942 = vmatpush1.msra.mxu0 0.0
  %943 = vmatprep.subr.mxu0 0.0
  %944 = vmatpush1.msra.mxu0 0.0
  %945 = vmatprep.subr.mxu0 0.0
  %946 = vmatpush1.msra.mxu0 0.0
  %947 = vmatprep.subr.mxu0 0.0
  %948 = vmatpush1.msra.mxu0 0.0
  %949 = vmatprep.subr.mxu0 0.0
  %950 = vmatpush1.msra.mxu0 0.0
  %951 = vmatprep.subr.mxu0 0.0
  %952 = vmatpush1.msra.mxu0 0.0
  %953 = vmatprep.subr.mxu0 0.0
  %954 = vmatpush1.msra.mxu0 0.0
  %955 = vmatprep.subr.mxu0 0.0
  %956 = vmatpush1.msra.mxu0 0.0
  %957 = vmatprep.subr.mxu0 0.0
  %958 = vmatpush1.msra.mxu0 0.0
  %959 = vmatprep.mubr.f32.mxu0 0.0
  %960 = vmatmul.mubr.f32.gmra.mrb[0].mxu0 %v893
  %v961 = vpop.f32.mrb[0].mxu0
  %v962 = vadd.f32 0.0, %v961
  %v963 = vpop.f32.mrb[0].mxu0
  %v964 = vadd.f32 0.0, %v963
  %965 = vdwg.mxu0
  %v968 = vrot.slane %v962, 2
  %v969 = vrot.slane %v964, 2
  %v972 = vadd.f32 %v122, %v968
  %v973 = vadd.f32 %v124, %v969
  %v974 = vxor.u32 %v972, 2147483648
  %v975 = vmul.f32 %v974, 1.442695
  %v976 = vpow.pop %v975
  %v977 = vadd.f32 %v976, 1.0
  %v978 = vrcp.pop %v977
  %v979 = vmul.f32 1.0, %v978
  %v980 = vtanh.pop %v973
  %v981 = vxor.u32 %v973, 2147483648
  %v982 = vmul.f32 %v981, 1.442695
  %v983 = vpow.pop %v982
  %v984 = vadd.f32 %v983, 1.0
  %v985 = vrcp.pop %v984
  %v986 = vmul.f32 1.0, %v985
  %v988 = vrot.slane %v886, 6
  %v990 = vmul.f32 %v979, %v988
  %v991 = vmul.f32 %v979, %v980
  %993 = vrot.lane.b32.xlu0 %v991, 64
  %v994 = vpop.permute.xlu0 %993
  %v996 = vadd.f32 %v990, %v994
  %v997 = vtanh.pop %v996
  %v998 = vmul.f32 %v986, %v997
  %v1000 = vrot.slane %v998, 6
  %1001 = vrot.lane.b32.xlu0 %v1000, 64
  %v1002 = vpop.permute.xlu0 %1001
  %v1003 = vsel %vm138, %v1002, 0
  %1005 = vmatprep.subr.mxu0 %v17
  %1006 = vmatpush1.msra.mxu0 %v16
  %1007 = vmatprep.subr.mxu0 %v19
  %1008 = vmatpush1.msra.mxu0 %v18
  %1009 = vmatprep.subr.mxu0 %v21
  %1010 = vmatpush1.msra.mxu0 %v20
  %1011 = vmatprep.subr.mxu0 %v23
  %1012 = vmatpush1.msra.mxu0 %v22
  %1013 = vmatprep.subr.mxu0 %v25
  %1014 = vmatpush1.msra.mxu0 %v24
  %1015 = vmatprep.subr.mxu0 %v27
  %1016 = vmatpush1.msra.mxu0 %v26
  %1017 = vmatprep.subr.mxu0 %v29
  %1018 = vmatpush1.msra.mxu0 %v28
  %1019 = vmatprep.subr.mxu0 %v31
  %1020 = vmatpush1.msra.mxu0 %v30
  %1021 = vmatprep.subr.mxu0 0.0
  %1022 = vmatpush1.msra.mxu0 0.0
  %1023 = vmatprep.subr.mxu0 0.0
  %1024 = vmatpush1.msra.mxu0 0.0
  %1025 = vmatprep.subr.mxu0 0.0
  %1026 = vmatpush1.msra.mxu0 0.0
  %1027 = vmatprep.subr.mxu0 0.0
  %1028 = vmatpush1.msra.mxu0 0.0
  %1029 = vmatprep.subr.mxu0 0.0
  %1030 = vmatpush1.msra.mxu0 0.0
  %1031 = vmatprep.subr.mxu0 0.0
  %1032 = vmatpush1.msra.mxu0 0.0
  %1033 = vmatprep.subr.mxu0 0.0
  %1034 = vmatpush1.msra.mxu0 0.0
  %1035 = vmatprep.subr.mxu0 0.0
  %1036 = vmatpush1.msra.mxu0 0.0
  %1037 = vmatprep.subr.mxu0 0.0
  %1038 = vmatpush1.msra.mxu0 0.0
  %1039 = vmatprep.subr.mxu0 0.0
  %1040 = vmatpush1.msra.mxu0 0.0
  %1041 = vmatprep.subr.mxu0 0.0
  %1042 = vmatpush1.msra.mxu0 0.0
  %1043 = vmatprep.subr.mxu0 0.0
  %1044 = vmatpush1.msra.mxu0 0.0
  %1045 = vmatprep.subr.mxu0 0.0
  %1046 = vmatpush1.msra.mxu0 0.0
  %1047 = vmatprep.subr.mxu0 0.0
  %1048 = vmatpush1.msra.mxu0 0.0
  %1049 = vmatprep.subr.mxu0 0.0
  %1050 = vmatpush1.msra.mxu0 0.0
  %1051 = vmatprep.subr.mxu0 0.0
  %1052 = vmatpush1.msra.mxu0 0.0
  %1053 = vmatprep.subr.mxu0 0.0
  %1054 = vmatpush1.msra.mxu0 0.0
  %1055 = vmatprep.subr.mxu0 0.0
  %1056 = vmatpush1.msra.mxu0 0.0
  %1057 = vmatprep.subr.mxu0 0.0
  %1058 = vmatpush1.msra.mxu0 0.0
  %1059 = vmatprep.subr.mxu0 0.0
  %1060 = vmatpush1.msra.mxu0 0.0
  %1061 = vmatprep.subr.mxu0 0.0
  %1062 = vmatpush1.msra.mxu0 0.0
  %1063 = vmatprep.subr.mxu0 0.0
  %1064 = vmatpush1.msra.mxu0 0.0
  %1065 = vmatprep.subr.mxu0 0.0
  %1066 = vmatpush1.msra.mxu0 0.0
  %1067 = vmatprep.subr.mxu0 0.0
  %1068 = vmatpush1.msra.mxu0 0.0
  %1069 = vmatprep.mubr.f32.mxu0 0.0
  %1070 = vmatmul.mubr.f32.gmra.mrb[0].mxu0 %v1003
  %v1071 = vpop.f32.mrb[0].mxu0
  %v1072 = vadd.f32 0.0, %v1071
  %v1073 = vpop.f32.mrb[0].mxu0
  %v1074 = vadd.f32 0.0, %v1073
  %1075 = vdwg.mxu0
  %v1076 = vadd.f32 %v128, %v1072
  %v1077 = vadd.f32 %v130, %v1074
  %v1078 = vxor.u32 %v1076, 2147483648
  %v1079 = vmul.f32 %v1078, 1.442695
  %v1080 = vpow.pop %v1079
  %v1081 = vadd.f32 %v1080, 1.0
  %v1082 = vrcp.pop %v1081
  %v1083 = vmul.f32 1.0, %v1082
  %v1084 = vtanh.pop %v1077
  %v1085 = vxor.u32 %v1077, 2147483648
  %v1086 = vmul.f32 %v1085, 1.442695
  %v1087 = vpow.pop %v1086
  %v1088 = vadd.f32 %v1087, 1.0
  %v1089 = vrcp.pop %v1088
  %v1090 = vmul.f32 1.0, %v1089
  %v1092 = vrot.slane %v996, 6
  %v1094 = vmul.f32 %v1083, %v1092
  %v1095 = vmul.f32 %v1083, %v1084
  %1097 = vrot.lane.b32.xlu0 %v1095, 64
  %v1098 = vpop.permute.xlu0 %1097
  %v1100 = vadd.f32 %v1094, %v1098
  %v1101 = vtanh.pop %v1100
  %v1102 = vmul.f32 %v1090, %v1101
  %1104 = vrot.lane.b32.xlu0 %v1102, 64
  %v1105 = vpop.permute.xlu0 %1104
  %v1106 = vsel %vm138, %v1105, 0
  %1108 = vmatprep.subr.mxu0 %v17
  %1109 = vmatpush1.msra.mxu0 %v16
  %1110 = vmatprep.subr.mxu0 %v19
  %1111 = vmatpush1.msra.mxu0 %v18
  %1112 = vmatprep.subr.mxu0 %v21
  %1113 = vmatpush1.msra.mxu0 %v20
  %1114 = vmatprep.subr.mxu0 %v23
  %1115 = vmatpush1.msra.mxu0 %v22
  %1116 = vmatprep.subr.mxu0 %v25
  %1117 = vmatpush1.msra.mxu0 %v24
  %1118 = vmatprep.subr.mxu0 %v27
  %1119 = vmatpush1.msra.mxu0 %v26
  %1120 = vmatprep.subr.mxu0 %v29
  %1121 = vmatpush1.msra.mxu0 %v28
  %1122 = vmatprep.subr.mxu0 %v31
  %1123 = vmatpush1.msra.mxu0 %v30
  %1124 = vmatprep.subr.mxu0 0.0
  %1125 = vmatpush1.msra.mxu0 0.0
  %1126 = vmatprep.subr.mxu0 0.0
  %1127 = vmatpush1.msra.mxu0 0.0
  %1128 = vmatprep.subr.mxu0 0.0
  %1129 = vmatpush1.msra.mxu0 0.0
  %1130 = vmatprep.subr.mxu0 0.0
  %1131 = vmatpush1.msra.mxu0 0.0
  %1132 = vmatprep.subr.mxu0 0.0
  %1133 = vmatpush1.msra.mxu0 0.0
  %1134 = vmatprep.subr.mxu0 0.0
  %1135 = vmatpush1.msra.mxu0 0.0
  %1136 = vmatprep.subr.mxu0 0.0
  %1137 = vmatpush1.msra.mxu0 0.0
  %1138 = vmatprep.subr.mxu0 0.0
  %1139 = vmatpush1.msra.mxu0 0.0
  %1140 = vmatprep.subr.mxu0 0.0
  %1141 = vmatpush1.msra.mxu0 0.0
  %1142 = vmatprep.subr.mxu0 0.0
  %1143 = vmatpush1.msra.mxu0 0.0
  %1144 = vmatprep.subr.mxu0 0.0
  %1145 = vmatpush1.msra.mxu0 0.0
  %1146 = vmatprep.subr.mxu0 0.0
  %1147 = vmatpush1.msra.mxu0 0.0
  %1148 = vmatprep.subr.mxu0 0.0
  %1149 = vmatpush1.msra.mxu0 0.0
  %1150 = vmatprep.subr.mxu0 0.0
  %1151 = vmatpush1.msra.mxu0 0.0
  %1152 = vmatprep.subr.mxu0 0.0
  %1153 = vmatpush1.msra.mxu0 0.0
  %1154 = vmatprep.subr.mxu0 0.0
  %1155 = vmatpush1.msra.mxu0 0.0
  %1156 = vmatprep.subr.mxu0 0.0
  %1157 = vmatpush1.msra.mxu0 0.0
  %1158 = vmatprep.subr.mxu0 0.0
  %1159 = vmatpush1.msra.mxu0 0.0
  %1160 = vmatprep.subr.mxu0 0.0
  %1161 = vmatpush1.msra.mxu0 0.0
  %1162 = vmatprep.subr.mxu0 0.0
  %1163 = vmatpush1.msra.mxu0 0.0
  %1164 = vmatprep.subr.mxu0 0.0
  %1165 = vmatpush1.msra.mxu0 0.0
  %1166 = vmatprep.subr.mxu0 0.0
  %1167 = vmatpush1.msra.mxu0 0.0
  %1168 = vmatprep.subr.mxu0 0.0
  %1169 = vmatpush1.msra.mxu0 0.0
  %1170 = vmatprep.subr.mxu0 0.0
  %1171 = vmatpush1.msra.mxu0 0.0
  %1172 = vmatprep.mubr.f32.mxu0 0.0
  %1173 = vmatmul.mubr.f32.gmra.mrb[0].mxu0 %v1106
  %v1174 = vpop.f32.mrb[0].mxu0
  %v1175 = vadd.f32 0.0, %v1174
  %v1176 = vpop.f32.mrb[0].mxu0
  %v1177 = vadd.f32 0.0, %v1176
  %1178 = vdwg.mxu0
  %v1181 = vrot.slane %v1175, 6
  %v1182 = vrot.slane %v1177, 6
  %v1185 = vadd.f32 %v128, %v1181
  %v1186 = vadd.f32 %v130, %v1182
  %v1187 = vxor.u32 %v1185, 2147483648
  %v1188 = vmul.f32 %v1187, 1.442695
  %v1189 = vpow.pop %v1188
  %v1190 = vadd.f32 %v1189, 1.0
  %v1191 = vrcp.pop %v1190
  %v1192 = vmul.f32 1.0, %v1191
  %v1193 = vtanh.pop %v1186
  %v1194 = vxor.u32 %v1186, 2147483648
  %v1195 = vmul.f32 %v1194, 1.442695
  %v1196 = vpow.pop %v1195
  %v1197 = vadd.f32 %v1196, 1.0
  %v1198 = vrcp.pop %v1197
  %v1199 = vmul.f32 1.0, %v1198
  %v1201 = vrot.slane %v1100, 6
  %v1203 = vmul.f32 %v1192, %v1201
  %v1204 = vmul.f32 %v1192, %v1193
  %1206 = vrot.lane.b32.xlu0 %v1204, 64
  %v1207 = vpop.permute.xlu0 %1206
  %v1209 = vadd.f32 %v1203, %v1207
  %v1210 = vtanh.pop %v1209
  %v1211 = vmul.f32 %v1199, %v1210
  %v1213 = vrot.slane %v1211, 2
  %1214 = vrot.lane.b32.xlu0 %v1213, 64
  %v1215 = vpop.permute.xlu0 %1214
  %v1216 = vsel %vm138, %v1215, 0
  %1218 = vmatprep.subr.mxu0 %v17
  %1219 = vmatpush1.msra.mxu0 %v16
  %1220 = vmatprep.subr.mxu0 %v19
  %1221 = vmatpush1.msra.mxu0 %v18
  %1222 = vmatprep.subr.mxu0 %v21
  %1223 = vmatpush1.msra.mxu0 %v20
  %1224 = vmatprep.subr.mxu0 %v23
  %1225 = vmatpush1.msra.mxu0 %v22
  %1226 = vmatprep.subr.mxu0 %v25
  %1227 = vmatpush1.msra.mxu0 %v24
  %1228 = vmatprep.subr.mxu0 %v27
  %1229 = vmatpush1.msra.mxu0 %v26
  %1230 = vmatprep.subr.mxu0 %v29
  %1231 = vmatpush1.msra.mxu0 %v28
  %1232 = vmatprep.subr.mxu0 %v31
  %1233 = vmatpush1.msra.mxu0 %v30
  %1234 = vmatprep.subr.mxu0 0.0
  %1235 = vmatpush1.msra.mxu0 0.0
  %1236 = vmatprep.subr.mxu0 0.0
  %1237 = vmatpush1.msra.mxu0 0.0
  %1238 = vmatprep.subr.mxu0 0.0
  %1239 = vmatpush1.msra.mxu0 0.0
  %1240 = vmatprep.subr.mxu0 0.0
  %1241 = vmatpush1.msra.mxu0 0.0
  %1242 = vmatprep.subr.mxu0 0.0
  %1243 = vmatpush1.msra.mxu0 0.0
  %1244 = vmatprep.subr.mxu0 0.0
  %1245 = vmatpush1.msra.mxu0 0.0
  %1246 = vmatprep.subr.mxu0 0.0
  %1247 = vmatpush1.msra.mxu0 0.0
  %1248 = vmatprep.subr.mxu0 0.0
  %1249 = vmatpush1.msra.mxu0 0.0
  %1250 = vmatprep.subr.mxu0 0.0
  %1251 = vmatpush1.msra.mxu0 0.0
  %1252 = vmatprep.subr.mxu0 0.0
  %1253 = vmatpush1.msra.mxu0 0.0
  %1254 = vmatprep.subr.mxu0 0.0
  %1255 = vmatpush1.msra.mxu0 0.0
  %1256 = vmatprep.subr.mxu0 0.0
  %1257 = vmatpush1.msra.mxu0 0.0
  %1258 = vmatprep.subr.mxu0 0.0
  %1259 = vmatpush1.msra.mxu0 0.0
  %1260 = vmatprep.subr.mxu0 0.0
  %1261 = vmatpush1.msra.mxu0 0.0
  %1262 = vmatprep.subr.mxu0 0.0
  %1263 = vmatpush1.msra.mxu0 0.0
  %1264 = vmatprep.subr.mxu0 0.0
  %1265 = vmatpush1.msra.mxu0 0.0
  %1266 = vmatprep.subr.mxu0 0.0
  %1267 = vmatpush1.msra.mxu0 0.0
  %1268 = vmatprep.subr.mxu0 0.0
  %1269 = vmatpush1.msra.mxu0 0.0
  %1270 = vmatprep.subr.mxu0 0.0
  %1271 = vmatpush1.msra.mxu0 0.0
  %1272 = vmatprep.subr.mxu0 0.0
  %1273 = vmatpush1.msra.mxu0 0.0
  %1274 = vmatprep.subr.mxu0 0.0
  %1275 = vmatpush1.msra.mxu0 0.0
  %1276 = vmatprep.subr.mxu0 0.0
  %1277 = vmatpush1.msra.mxu0 0.0
  %1278 = vmatprep.subr.mxu0 0.0
  %1279 = vmatpush1.msra.mxu0 0.0
  %1280 = vmatprep.subr.mxu0 0.0
  %1281 = vmatpush1.msra.mxu0 0.0
  %1282 = vmatprep.mubr.f32.mxu0 0.0
  %1283 = vmatmul.mubr.f32.gmra.mrb[0].mxu0 %v1216
  %v1284 = vpop.f32.mrb[0].mxu0
  %v1285 = vadd.f32 0.0, %v1284
  %v1286 = vpop.f32.mrb[0].mxu0
  %v1287 = vadd.f32 0.0, %v1286
  %1288 = vdwg.mxu0
  %v1291 = vrot.slane %v1285, 4
  %v1292 = vrot.slane %v1287, 4
  %v1295 = vadd.f32 %v128, %v1291
  %v1296 = vadd.f32 %v130, %v1292
  %v1297 = vxor.u32 %v1295, 2147483648
  %v1298 = vmul.f32 %v1297, 1.442695
  %v1299 = vpow.pop %v1298
  %v1300 = vadd.f32 %v1299, 1.0
  %v1301 = vrcp.pop %v1300
  %v1302 = vmul.f32 1.0, %v1301
  %v1303 = vtanh.pop %v1296
  %v1304 = vxor.u32 %v1296, 2147483648
  %v1305 = vmul.f32 %v1304, 1.442695
  %v1306 = vpow.pop %v1305
  %v1307 = vadd.f32 %v1306, 1.0
  %v1308 = vrcp.pop %v1307
  %v1309 = vmul.f32 1.0, %v1308
  %v1311 = vrot.slane %v1209, 6
  %v1313 = vmul.f32 %v1302, %v1311
  %v1314 = vmul.f32 %v1302, %v1303
  %1316 = vrot.lane.b32.xlu0 %v1314, 64
  %v1317 = vpop.permute.xlu0 %1316
  %v1319 = vadd.f32 %v1313, %v1317
  %v1320 = vtanh.pop %v1319
  %v1321 = vmul.f32 %v1309, %v1320
  %v1323 = vrot.slane %v1321, 4
  %1324 = vrot.lane.b32.xlu0 %v1323, 64
  %v1325 = vpop.permute.xlu0 %1324
  %v1326 = vsel %vm138, %v1325, 0
  %1328 = vmatprep.subr.mxu0 %v17
  %1329 = vmatpush1.msra.mxu0 %v16
  %1330 = vmatprep.subr.mxu0 %v19
  %1331 = vmatpush1.msra.mxu0 %v18
  %1332 = vmatprep.subr.mxu0 %v21
  %1333 = vmatpush1.msra.mxu0 %v20
  %1334 = vmatprep.subr.mxu0 %v23
  %1335 = vmatpush1.msra.mxu0 %v22
  %1336 = vmatprep.subr.mxu0 %v25
  %1337 = vmatpush1.msra.mxu0 %v24
  %1338 = vmatprep.subr.mxu0 %v27
  %1339 = vmatpush1.msra.mxu0 %v26
  %1340 = vmatprep.subr.mxu0 %v29
  %1341 = vmatpush1.msra.mxu0 %v28
  %1342 = vmatprep.subr.mxu0 %v31
  %1343 = vmatpush1.msra.mxu0 %v30
  %1344 = vmatprep.subr.mxu0 0.0
  %1345 = vmatpush1.msra.mxu0 0.0
  %1346 = vmatprep.subr.mxu0 0.0
  %1347 = vmatpush1.msra.mxu0 0.0
  %1348 = vmatprep.subr.mxu0 0.0
  %1349 = vmatpush1.msra.mxu0 0.0
  %1350 = vmatprep.subr.mxu0 0.0
  %1351 = vmatpush1.msra.mxu0 0.0
  %1352 = vmatprep.subr.mxu0 0.0
  %1353 = vmatpush1.msra.mxu0 0.0
  %1354 = vmatprep.subr.mxu0 0.0
  %1355 = vmatpush1.msra.mxu0 0.0
  %1356 = vmatprep.subr.mxu0 0.0
  %1357 = vmatpush1.msra.mxu0 0.0
  %1358 = vmatprep.subr.mxu0 0.0
  %1359 = vmatpush1.msra.mxu0 0.0
  %1360 = vmatprep.subr.mxu0 0.0
  %1361 = vmatpush1.msra.mxu0 0.0
  %1362 = vmatprep.subr.mxu0 0.0
  %1363 = vmatpush1.msra.mxu0 0.0
  %1364 = vmatprep.subr.mxu0 0.0
  %1365 = vmatpush1.msra.mxu0 0.0
  %1366 = vmatprep.subr.mxu0 0.0
  %1367 = vmatpush1.msra.mxu0 0.0
  %1368 = vmatprep.subr.mxu0 0.0
  %1369 = vmatpush1.msra.mxu0 0.0
  %1370 = vmatprep.subr.mxu0 0.0
  %1371 = vmatpush1.msra.mxu0 0.0
  %1372 = vmatprep.subr.mxu0 0.0
  %1373 = vmatpush1.msra.mxu0 0.0
  %1374 = vmatprep.subr.mxu0 0.0
  %1375 = vmatpush1.msra.mxu0 0.0
  %1376 = vmatprep.subr.mxu0 0.0
  %1377 = vmatpush1.msra.mxu0 0.0
  %1378 = vmatprep.subr.mxu0 0.0
  %1379 = vmatpush1.msra.mxu0 0.0
  %1380 = vmatprep.subr.mxu0 0.0
  %1381 = vmatpush1.msra.mxu0 0.0
  %1382 = vmatprep.subr.mxu0 0.0
  %1383 = vmatpush1.msra.mxu0 0.0
  %1384 = vmatprep.subr.mxu0 0.0
  %1385 = vmatpush1.msra.mxu0 0.0
  %1386 = vmatprep.subr.mxu0 0.0
  %1387 = vmatpush1.msra.mxu0 0.0
  %1388 = vmatprep.subr.mxu0 0.0
  %1389 = vmatpush1.msra.mxu0 0.0
  %1390 = vmatprep.subr.mxu0 0.0
  %1391 = vmatpush1.msra.mxu0 0.0
  %1392 = vmatprep.mubr.f32.mxu0 0.0
  %1393 = vmatmul.mubr.f32.gmra.mrb[0].mxu0 %v1326
  %v1394 = vpop.f32.mrb[0].mxu0
  %v1395 = vadd.f32 0.0, %v1394
  %v1396 = vpop.f32.mrb[0].mxu0
  %v1397 = vadd.f32 0.0, %v1396
  %1398 = vdwg.mxu0
  %v1401 = vrot.slane %v1395, 2
  %v1402 = vrot.slane %v1397, 2
  %v1405 = vadd.f32 %v128, %v1401
  %v1406 = vadd.f32 %v130, %v1402
  %v1407 = vxor.u32 %v1405, 2147483648
  %v1408 = vmul.f32 %v1407, 1.442695
  %v1409 = vpow.pop %v1408
  %v1410 = vadd.f32 %v1409, 1.0
  %v1411 = vrcp.pop %v1410
  %v1412 = vmul.f32 1.0, %v1411
  %v1413 = vtanh.pop %v1406
  %v1414 = vxor.u32 %v1406, 2147483648
  %v1415 = vmul.f32 %v1414, 1.442695
  %v1416 = vpow.pop %v1415
  %v1417 = vadd.f32 %v1416, 1.0
  %v1418 = vrcp.pop %v1417
  %v1419 = vmul.f32 1.0, %v1418
  %v1421 = vrot.slane %v1319, 6
  %v1423 = vmul.f32 %v1412, %v1421
  %v1424 = vmul.f32 %v1412, %v1413
  %1426 = vrot.lane.b32.xlu0 %v1424, 64
  %v1427 = vpop.permute.xlu0 %1426
  %v1429 = vadd.f32 %v1423, %v1427
  %v1430 = vtanh.pop %v1429
  %v1431 = vmul.f32 %v1419, %v1430
  %v1433 = vrot.slane %v1431, 6
  %1434 = vrot.lane.b32.xlu0 %v1433, 64
  %v1435 = vpop.permute.xlu0 %1434
  %v1436 = vsel %vm138, %v1435, 0
  %1438 = vmatprep.subr.mxu0 %v17
  %1439 = vmatpush1.msra.mxu0 %v16
  %1440 = vmatprep.subr.mxu0 %v19
  %1441 = vmatpush1.msra.mxu0 %v18
  %1442 = vmatprep.subr.mxu0 %v21
  %1443 = vmatpush1.msra.mxu0 %v20
  %1444 = vmatprep.subr.mxu0 %v23
  %1445 = vmatpush1.msra.mxu0 %v22
  %1446 = vmatprep.subr.mxu0 %v25
  %1447 = vmatpush1.msra.mxu0 %v24
  %1448 = vmatprep.subr.mxu0 %v27
  %1449 = vmatpush1.msra.mxu0 %v26
  %1450 = vmatprep.subr.mxu0 %v29
  %1451 = vmatpush1.msra.mxu0 %v28
  %1452 = vmatprep.subr.mxu0 %v31
  %1453 = vmatpush1.msra.mxu0 %v30
  %1454 = vmatprep.subr.mxu0 0.0
  %1455 = vmatpush1.msra.mxu0 0.0
  %1456 = vmatprep.subr.mxu0 0.0
  %1457 = vmatpush1.msra.mxu0 0.0
  %1458 = vmatprep.subr.mxu0 0.0
  %1459 = vmatpush1.msra.mxu0 0.0
  %1460 = vmatprep.subr.mxu0 0.0
  %1461 = vmatpush1.msra.mxu0 0.0
  %1462 = vmatprep.subr.mxu0 0.0
  %1463 = vmatpush1.msra.mxu0 0.0
  %1464 = vmatprep.subr.mxu0 0.0
  %1465 = vmatpush1.msra.mxu0 0.0
  %1466 = vmatprep.subr.mxu0 0.0
  %1467 = vmatpush1.msra.mxu0 0.0
  %1468 = vmatprep.subr.mxu0 0.0
  %1469 = vmatpush1.msra.mxu0 0.0
  %1470 = vmatprep.subr.mxu0 0.0
  %1471 = vmatpush1.msra.mxu0 0.0
  %1472 = vmatprep.subr.mxu0 0.0
  %1473 = vmatpush1.msra.mxu0 0.0
  %1474 = vmatprep.subr.mxu0 0.0
  %1475 = vmatpush1.msra.mxu0 0.0
  %1476 = vmatprep.subr.mxu0 0.0
  %1477 = vmatpush1.msra.mxu0 0.0
  %1478 = vmatprep.subr.mxu0 0.0
  %1479 = vmatpush1.msra.mxu0 0.0
  %1480 = vmatprep.subr.mxu0 0.0
  %1481 = vmatpush1.msra.mxu0 0.0
  %1482 = vmatprep.subr.mxu0 0.0
  %1483 = vmatpush1.msra.mxu0 0.0
  %1484 = vmatprep.subr.mxu0 0.0
  %1485 = vmatpush1.msra.mxu0 0.0
  %1486 = vmatprep.subr.mxu0 0.0
  %1487 = vmatpush1.msra.mxu0 0.0
  %1488 = vmatprep.subr.mxu0 0.0
  %1489 = vmatpush1.msra.mxu0 0.0
  %1490 = vmatprep.subr.mxu0 0.0
  %1491 = vmatpush1.msra.mxu0 0.0
  %1492 = vmatprep.subr.mxu0 0.0
  %1493 = vmatpush1.msra.mxu0 0.0
  %1494 = vmatprep.subr.mxu0 0.0
  %1495 = vmatpush1.msra.mxu0 0.0
  %1496 = vmatprep.subr.mxu0 0.0
  %1497 = vmatpush1.msra.mxu0 0.0
  %1498 = vmatprep.subr.mxu0 0.0
  %1499 = vmatpush1.msra.mxu0 0.0
  %1500 = vmatprep.subr.mxu0 0.0
  %1501 = vmatpush1.msra.mxu0 0.0
  %1502 = vmatprep.mubr.f32.mxu0 0.0
  %1503 = vmatmul.mubr.f32.gmra.mrb[0].mxu0 %v1436
  %v1504 = vpop.f32.mrb[0].mxu0
  %v1505 = vadd.f32 0.0, %v1504
  %v1506 = vpop.f32.mrb[0].mxu0
  %v1507 = vadd.f32 0.0, %v1506
  %1508 = vdwg.mxu0
  %v1509 = vadd.f32 %v134, %v1505
  %v1510 = vadd.f32 %v136, %v1507
  %v1511 = vxor.u32 %v1509, 2147483648
  %v1512 = vmul.f32 %v1511, 1.442695
  %v1513 = vpow.pop %v1512
  %v1514 = vadd.f32 %v1513, 1.0
  %v1515 = vrcp.pop %v1514
  %v1516 = vmul.f32 1.0, %v1515
  %v1517 = vtanh.pop %v1510
  %v1518 = vxor.u32 %v1510, 2147483648
  %v1519 = vmul.f32 %v1518, 1.442695
  %v1520 = vpow.pop %v1519
  %v1521 = vadd.f32 %v1520, 1.0
  %v1522 = vrcp.pop %v1521
  %v1523 = vmul.f32 1.0, %v1522
  %v1525 = vrot.slane %v1429, 6
  %v1527 = vmul.f32 %v1516, %v1525
  %v1528 = vmul.f32 %v1516, %v1517
  %1530 = vrot.lane.b32.xlu0 %v1528, 64
  %v1531 = vpop.permute.xlu0 %1530
  %v1533 = vadd.f32 %v1527, %v1531
  %v1534 = vtanh.pop %v1533
  %v1535 = vmul.f32 %v1523, %v1534
  %1537 = vrot.lane.b32.xlu0 %v1535, 64
  %v1538 = vpop.permute.xlu0 %1537
  %v1539 = vsel %vm138, %v1538, 0
  %1541 = vmatprep.subr.mxu0 %v17
  %1542 = vmatpush1.msra.mxu0 %v16
  %1543 = vmatprep.subr.mxu0 %v19
  %1544 = vmatpush1.msra.mxu0 %v18
  %1545 = vmatprep.subr.mxu0 %v21
  %1546 = vmatpush1.msra.mxu0 %v20
  %1547 = vmatprep.subr.mxu0 %v23
  %1548 = vmatpush1.msra.mxu0 %v22
  %1549 = vmatprep.subr.mxu0 %v25
  %1550 = vmatpush1.msra.mxu0 %v24
  %1551 = vmatprep.subr.mxu0 %v27
  %1552 = vmatpush1.msra.mxu0 %v26
  %1553 = vmatprep.subr.mxu0 %v29
  %1554 = vmatpush1.msra.mxu0 %v28
  %1555 = vmatprep.subr.mxu0 %v31
  %1556 = vmatpush1.msra.mxu0 %v30
  %1557 = vmatprep.subr.mxu0 0.0
  %1558 = vmatpush1.msra.mxu0 0.0
  %1559 = vmatprep.subr.mxu0 0.0
  %1560 = vmatpush1.msra.mxu0 0.0
  %1561 = vmatprep.subr.mxu0 0.0
  %1562 = vmatpush1.msra.mxu0 0.0
  %1563 = vmatprep.subr.mxu0 0.0
  %1564 = vmatpush1.msra.mxu0 0.0
  %1565 = vmatprep.subr.mxu0 0.0
  %1566 = vmatpush1.msra.mxu0 0.0
  %1567 = vmatprep.subr.mxu0 0.0
  %1568 = vmatpush1.msra.mxu0 0.0
  %1569 = vmatprep.subr.mxu0 0.0
  %1570 = vmatpush1.msra.mxu0 0.0
  %1571 = vmatprep.subr.mxu0 0.0
  %1572 = vmatpush1.msra.mxu0 0.0
  %1573 = vmatprep.subr.mxu0 0.0
  %1574 = vmatpush1.msra.mxu0 0.0
  %1575 = vmatprep.subr.mxu0 0.0
  %1576 = vmatpush1.msra.mxu0 0.0
  %1577 = vmatprep.subr.mxu0 0.0
  %1578 = vmatpush1.msra.mxu0 0.0
  %1579 = vmatprep.subr.mxu0 0.0
  %1580 = vmatpush1.msra.mxu0 0.0
  %1581 = vmatprep.subr.mxu0 0.0
  %1582 = vmatpush1.msra.mxu0 0.0
  %1583 = vmatprep.subr.mxu0 0.0
  %1584 = vmatpush1.msra.mxu0 0.0
  %1585 = vmatprep.subr.mxu0 0.0
  %1586 = vmatpush1.msra.mxu0 0.0
  %1587 = vmatprep.subr.mxu0 0.0
  %1588 = vmatpush1.msra.mxu0 0.0
  %1589 = vmatprep.subr.mxu0 0.0
  %1590 = vmatpush1.msra.mxu0 0.0
  %1591 = vmatprep.subr.mxu0 0.0
  %1592 = vmatpush1.msra.mxu0 0.0
  %1593 = vmatprep.subr.mxu0 0.0
  %1594 = vmatpush1.msra.mxu0 0.0
  %1595 = vmatprep.subr.mxu0 0.0
  %1596 = vmatpush1.msra.mxu0 0.0
  %1597 = vmatprep.subr.mxu0 0.0
  %1598 = vmatpush1.msra.mxu0 0.0
  %1599 = vmatprep.subr.mxu0 0.0
  %1600 = vmatpush1.msra.mxu0 0.0
  %1601 = vmatprep.subr.mxu0 0.0
  %1602 = vmatpush1.msra.mxu0 0.0
  %1603 = vmatprep.subr.mxu0 0.0
  %1604 = vmatpush1.msra.mxu0 0.0
  %1605 = vmatprep.mubr.f32.mxu0 0.0
  %1606 = vmatmul.mubr.f32.gmra.mrb[0].mxu0 %v1539
  %v1607 = vpop.f32.mrb[0].mxu0
  %v1608 = vadd.f32 0.0, %v1607
  %v1609 = vpop.f32.mrb[0].mxu0
  %v1610 = vadd.f32 0.0, %v1609
  %1611 = vdwg.mxu0
  %v1614 = vrot.slane %v1608, 6
  %v1615 = vrot.slane %v1610, 6
  %v1618 = vadd.f32 %v134, %v1614
  %v1619 = vadd.f32 %v136, %v1615
  %v1620 = vxor.u32 %v1618, 2147483648
  %v1621 = vmul.f32 %v1620, 1.442695
  %v1622 = vpow.pop %v1621
  %v1623 = vadd.f32 %v1622, 1.0
  %v1624 = vrcp.pop %v1623
  %v1625 = vmul.f32 1.0, %v1624
  %v1626 = vtanh.pop %v1619
  %v1627 = vxor.u32 %v1619, 2147483648
  %v1628 = vmul.f32 %v1627, 1.442695
  %v1629 = vpow.pop %v1628
  %v1630 = vadd.f32 %v1629, 1.0
  %v1631 = vrcp.pop %v1630
  %v1632 = vmul.f32 1.0, %v1631
  %v1634 = vrot.slane %v1533, 6
  %v1636 = vmul.f32 %v1625, %v1634
  %v1637 = vmul.f32 %v1625, %v1626
  %1639 = vrot.lane.b32.xlu0 %v1637, 64
  %v1640 = vpop.permute.xlu0 %1639
  %v1642 = vadd.f32 %v1636, %v1640
  %v1643 = vtanh.pop %v1642
  %v1644 = vmul.f32 %v1632, %v1643
  %v1646 = vrot.slane %v1644, 2
  %1647 = vrot.lane.b32.xlu0 %v1646, 64
  %v1648 = vpop.permute.xlu0 %1647
  %v1649 = vsel %vm138, %v1648, 0
  %1651 = vmatprep.subr.mxu0 %v17
  %1652 = vmatpush1.msra.mxu0 %v16
  %1653 = vmatprep.subr.mxu0 %v19
  %1654 = vmatpush1.msra.mxu0 %v18
  %1655 = vmatprep.subr.mxu0 %v21
  %1656 = vmatpush1.msra.mxu0 %v20
  %1657 = vmatprep.subr.mxu0 %v23
  %1658 = vmatpush1.msra.mxu0 %v22
  %1659 = vmatprep.subr.mxu0 %v25
  %1660 = vmatpush1.msra.mxu0 %v24
  %1661 = vmatprep.subr.mxu0 %v27
  %1662 = vmatpush1.msra.mxu0 %v26
  %1663 = vmatprep.subr.mxu0 %v29
  %1664 = vmatpush1.msra.mxu0 %v28
  %1665 = vmatprep.subr.mxu0 %v31
  %1666 = vmatpush1.msra.mxu0 %v30
  %1667 = vmatprep.subr.mxu0 0.0
  %1668 = vmatpush1.msra.mxu0 0.0
  %1669 = vmatprep.subr.mxu0 0.0
  %1670 = vmatpush1.msra.mxu0 0.0
  %1671 = vmatprep.subr.mxu0 0.0
  %1672 = vmatpush1.msra.mxu0 0.0
  %1673 = vmatprep.subr.mxu0 0.0
  %1674 = vmatpush1.msra.mxu0 0.0
  %1675 = vmatprep.subr.mxu0 0.0
  %1676 = vmatpush1.msra.mxu0 0.0
  %1677 = vmatprep.subr.mxu0 0.0
  %1678 = vmatpush1.msra.mxu0 0.0
  %1679 = vmatprep.subr.mxu0 0.0
  %1680 = vmatpush1.msra.mxu0 0.0
  %1681 = vmatprep.subr.mxu0 0.0
  %1682 = vmatpush1.msra.mxu0 0.0
  %1683 = vmatprep.subr.mxu0 0.0
  %1684 = vmatpush1.msra.mxu0 0.0
  %1685 = vmatprep.subr.mxu0 0.0
  %1686 = vmatpush1.msra.mxu0 0.0
  %1687 = vmatprep.subr.mxu0 0.0
  %1688 = vmatpush1.msra.mxu0 0.0
  %1689 = vmatprep.subr.mxu0 0.0
  %1690 = vmatpush1.msra.mxu0 0.0
  %1691 = vmatprep.subr.mxu0 0.0
  %1692 = vmatpush1.msra.mxu0 0.0
  %1693 = vmatprep.subr.mxu0 0.0
  %1694 = vmatpush1.msra.mxu0 0.0
  %1695 = vmatprep.subr.mxu0 0.0
  %1696 = vmatpush1.msra.mxu0 0.0
  %1697 = vmatprep.subr.mxu0 0.0
  %1698 = vmatpush1.msra.mxu0 0.0
  %1699 = vmatprep.subr.mxu0 0.0
  %1700 = vmatpush1.msra.mxu0 0.0
  %1701 = vmatprep.subr.mxu0 0.0
  %1702 = vmatpush1.msra.mxu0 0.0
  %1703 = vmatprep.subr.mxu0 0.0
  %1704 = vmatpush1.msra.mxu0 0.0
  %1705 = vmatprep.subr.mxu0 0.0
  %1706 = vmatpush1.msra.mxu0 0.0
  %1707 = vmatprep.subr.mxu0 0.0
  %1708 = vmatpush1.msra.mxu0 0.0
  %1709 = vmatprep.subr.mxu0 0.0
  %1710 = vmatpush1.msra.mxu0 0.0
  %1711 = vmatprep.subr.mxu0 0.0
  %1712 = vmatpush1.msra.mxu0 0.0
  %1713 = vmatprep.subr.mxu0 0.0
  %1714 = vmatpush1.msra.mxu0 0.0
  %1715 = vmatprep.mubr.f32.mxu0 0.0
  %1716 = vmatmul.mubr.f32.gmra.mrb[0].mxu0 %v1649
  %v1717 = vpop.f32.mrb[0].mxu0
  %v1718 = vadd.f32 0.0, %v1717
  %v1719 = vpop.f32.mrb[0].mxu0
  %v1720 = vadd.f32 0.0, %v1719
  %1721 = vdwg.mxu0
  %v1724 = vrot.slane %v1718, 4
  %v1725 = vrot.slane %v1720, 4
  %v1728 = vadd.f32 %v134, %v1724
  %v1729 = vadd.f32 %v136, %v1725
  %v1730 = vxor.u32 %v1728, 2147483648
  %v1731 = vmul.f32 %v1730, 1.442695
  %v1732 = vpow.pop %v1731
  %v1733 = vadd.f32 %v1732, 1.0
  %v1734 = vrcp.pop %v1733
  %v1735 = vmul.f32 1.0, %v1734
  %v1736 = vtanh.pop %v1729
  %v1737 = vxor.u32 %v1729, 2147483648
  %v1738 = vmul.f32 %v1737, 1.442695
  %v1739 = vpow.pop %v1738
  %v1740 = vadd.f32 %v1739, 1.0
  %v1741 = vrcp.pop %v1740
  %v1742 = vmul.f32 1.0, %v1741
  %v1744 = vrot.slane %v1642, 6
  %v1746 = vmul.f32 %v1735, %v1744
  %v1747 = vmul.f32 %v1735, %v1736
  %1749 = vrot.lane.b32.xlu0 %v1747, 64
  %v1750 = vpop.permute.xlu0 %1749
  %v1752 = vadd.f32 %v1746, %v1750
  %v1753 = vtanh.pop %v1752
  %v1754 = vmul.f32 %v1742, %v1753
  %v1756 = vrot.slane %v1754, 4
  %1757 = vrot.lane.b32.xlu0 %v1756, 64
  %v1758 = vpop.permute.xlu0 %1757
  %v1759 = vsel %vm138, %v1758, 0
  %1761 = vmatprep.subr.mxu0 %v17
  %1762 = vmatpush1.msra.mxu0 %v16
  %1763 = vmatprep.subr.mxu0 %v19
  %1764 = vmatpush1.msra.mxu0 %v18
  %1765 = vmatprep.subr.mxu0 %v21
  %1766 = vmatpush1.msra.mxu0 %v20
  %1767 = vmatprep.subr.mxu0 %v23
  %1768 = vmatpush1.msra.mxu0 %v22
  %1769 = vmatprep.subr.mxu0 %v25
  %1770 = vmatpush1.msra.mxu0 %v24
  %1771 = vmatprep.subr.mxu0 %v27
  %1772 = vmatpush1.msra.mxu0 %v26
  %1773 = vmatprep.subr.mxu0 %v29
  %1774 = vmatpush1.msra.mxu0 %v28
  %1775 = vmatprep.subr.mxu0 %v31
  %1776 = vmatpush1.msra.mxu0 %v30
  %1777 = vmatprep.subr.mxu0 0.0
  %1778 = vmatpush1.msra.mxu0 0.0
  %1779 = vmatprep.subr.mxu0 0.0
  %1780 = vmatpush1.msra.mxu0 0.0
  %1781 = vmatprep.subr.mxu0 0.0
  %1782 = vmatpush1.msra.mxu0 0.0
  %1783 = vmatprep.subr.mxu0 0.0
  %1784 = vmatpush1.msra.mxu0 0.0
  %1785 = vmatprep.subr.mxu0 0.0
  %1786 = vmatpush1.msra.mxu0 0.0
  %1787 = vmatprep.subr.mxu0 0.0
  %1788 = vmatpush1.msra.mxu0 0.0
  %1789 = vmatprep.subr.mxu0 0.0
  %1790 = vmatpush1.msra.mxu0 0.0
  %1791 = vmatprep.subr.mxu0 0.0
  %1792 = vmatpush1.msra.mxu0 0.0
  %1793 = vmatprep.subr.mxu0 0.0
  %1794 = vmatpush1.msra.mxu0 0.0
  %1795 = vmatprep.subr.mxu0 0.0
  %1796 = vmatpush1.msra.mxu0 0.0
  %1797 = vmatprep.subr.mxu0 0.0
  %1798 = vmatpush1.msra.mxu0 0.0
  %1799 = vmatprep.subr.mxu0 0.0
  %1800 = vmatpush1.msra.mxu0 0.0
  %1801 = vmatprep.subr.mxu0 0.0
  %1802 = vmatpush1.msra.mxu0 0.0
  %1803 = vmatprep.subr.mxu0 0.0
  %1804 = vmatpush1.msra.mxu0 0.0
  %1805 = vmatprep.subr.mxu0 0.0
  %1806 = vmatpush1.msra.mxu0 0.0
  %1807 = vmatprep.subr.mxu0 0.0
  %1808 = vmatpush1.msra.mxu0 0.0
  %1809 = vmatprep.subr.mxu0 0.0
  %1810 = vmatpush1.msra.mxu0 0.0
  %1811 = vmatprep.subr.mxu0 0.0
  %1812 = vmatpush1.msra.mxu0 0.0
  %1813 = vmatprep.subr.mxu0 0.0
  %1814 = vmatpush1.msra.mxu0 0.0
  %1815 = vmatprep.subr.mxu0 0.0
  %1816 = vmatpush1.msra.mxu0 0.0
  %1817 = vmatprep.subr.mxu0 0.0
  %1818 = vmatpush1.msra.mxu0 0.0
  %1819 = vmatprep.subr.mxu0 0.0
  %1820 = vmatpush1.msra.mxu0 0.0
  %1821 = vmatprep.subr.mxu0 0.0
  %1822 = vmatpush1.msra.mxu0 0.0
  %1823 = vmatprep.subr.mxu0 0.0
  %1824 = vmatpush1.msra.mxu0 0.0
  %1825 = vmatprep.mubr.f32.mxu0 0.0
  %1826 = vmatmul.mubr.f32.gmra.mrb[0].mxu0 %v1759
  %v1827 = vpop.f32.mrb[0].mxu0
  %v1828 = vadd.f32 0.0, %v1827
  %v1829 = vpop.f32.mrb[0].mxu0
  %v1830 = vadd.f32 0.0, %v1829
  %1831 = vdwg.mxu0
  %v1834 = vrot.slane %v1828, 2
  %v1835 = vrot.slane %v1830, 2
  %v1838 = vadd.f32 %v134, %v1834
  %v1839 = vadd.f32 %v136, %v1835
  %v1840 = vxor.u32 %v1838, 2147483648
  %v1841 = vmul.f32 %v1840, 1.442695
  %v1842 = vpow.pop %v1841
  %v1843 = vadd.f32 %v1842, 1.0
  %v1844 = vrcp.pop %v1843
  %v1845 = vmul.f32 1.0, %v1844
  %v1846 = vtanh.pop %v1839
  %v1847 = vxor.u32 %v1839, 2147483648
  %v1848 = vmul.f32 %v1847, 1.442695
  %v1849 = vpow.pop %v1848
  %v1850 = vadd.f32 %v1849, 1.0
  %v1851 = vrcp.pop %v1850
  %v1852 = vmul.f32 1.0, %v1851
  %v1854 = vrot.slane %v1752, 6
  %v1856 = vmul.f32 %v1845, %v1854
  %v1857 = vmul.f32 %v1845, %v1846
  %1859 = vrot.lane.b32.xlu0 %v1857, 64
  %v1860 = vpop.permute.xlu0 %1859
  %v1862 = vadd.f32 %v1856, %v1860
  %v1863 = vtanh.pop %v1862
  %v1864 = vmul.f32 %v1852, %v1863
  %v1865 = vld [vmem:[%s2] sm:$0xff]
  %v1866 = vld [vmem:[%s2 + $0x8] sm:$0xff]
  %v1867 = vld [vmem:[%s2 + $0x10] sm:$0xff]
  %v1868 = vld [vmem:[%s2 + $0x18] sm:$0xff]
  %v1869 = vld [vmem:[%s2 + $0x20] sm:$0xff]
  %v1870 = vld [vmem:[%s2 + $0x28] sm:$0xff]
  %v1871 = vld [vmem:[%s2 + $0x30] sm:$0xff]
  %v1872 = vld [vmem:[%s2 + $0x38] sm:$0xff]
  %v1873 = vld [vmem:[%s2 + $0x40] sm:$0x1]
  %v1874 = vld [vmem:[%s2 + $0x48] sm:$0xff]
  %v1875 = vld [vmem:[%s2 + $0x50] sm:$0xff]
  %v1876 = vld [vmem:[%s2 + $0x58] sm:$0x1]
  %v1877 = vlaneseq
  %v1878 = vshrl.u32 %v1877, 7
  %v1879 = vsub.s32 0, %v1878
  %v1880 = vrot.slane %v1873, %v1879
  %v1882 = vrot.slane %v1864, 6
  %1883 = vrot.lane.b32.xlu0 %v1882, 64
  %v1884 = vpop.permute.xlu0 %1883
  %v1885 = vsel %vm138, %v1884, 0
  %1887 = vmatprep.subr.mxu0 0.0
  %1888 = vmatpush1.msra.mxu0 %v1865
  %1889 = vmatprep.subr.mxu0 0.0
  %1890 = vmatpush1.msra.mxu0 %v1866
  %1891 = vmatprep.subr.mxu0 0.0
  %1892 = vmatpush1.msra.mxu0 %v1867
  %1893 = vmatprep.subr.mxu0 0.0
  %1894 = vmatpush1.msra.mxu0 %v1868
  %1895 = vmatprep.subr.mxu0 0.0
  %1896 = vmatpush1.msra.mxu0 %v1869
  %1897 = vmatprep.subr.mxu0 0.0
  %1898 = vmatpush1.msra.mxu0 %v1870
  %1899 = vmatprep.subr.mxu0 0.0
  %1900 = vmatpush1.msra.mxu0 %v1871
  %1901 = vmatprep.subr.mxu0 0.0
  %1902 = vmatpush1.msra.mxu0 %v1872
  %1903 = vmatprep.subr.mxu0 0.0
  %1904 = vmatpush1.msra.mxu0 0.0
  %1905 = vmatprep.subr.mxu0 0.0
  %1906 = vmatpush1.msra.mxu0 0.0
  %1907 = vmatprep.subr.mxu0 0.0
  %1908 = vmatpush1.msra.mxu0 0.0
  %1909 = vmatprep.subr.mxu0 0.0
  %1910 = vmatpush1.msra.mxu0 0.0
  %1911 = vmatprep.subr.mxu0 0.0
  %1912 = vmatpush1.msra.mxu0 0.0
  %1913 = vmatprep.subr.mxu0 0.0
  %1914 = vmatpush1.msra.mxu0 0.0
  %1915 = vmatprep.subr.mxu0 0.0
  %1916 = vmatpush1.msra.mxu0 0.0
  %1917 = vmatprep.subr.mxu0 0.0
  %1918 = vmatpush1.msra.mxu0 0.0
  %1919 = vmatprep.subr.mxu0 0.0
  %1920 = vmatpush1.msra.mxu0 0.0
  %1921 = vmatprep.subr.mxu0 0.0
  %1922 = vmatpush1.msra.mxu0 0.0
  %1923 = vmatprep.subr.mxu0 0.0
  %1924 = vmatpush1.msra.mxu0 0.0
  %1925 = vmatprep.subr.mxu0 0.0
  %1926 = vmatpush1.msra.mxu0 0.0
  %1927 = vmatprep.subr.mxu0 0.0
  %1928 = vmatpush1.msra.mxu0 0.0
  %1929 = vmatprep.subr.mxu0 0.0
  %1930 = vmatpush1.msra.mxu0 0.0
  %1931 = vmatprep.subr.mxu0 0.0
  %1932 = vmatpush1.msra.mxu0 0.0
  %1933 = vmatprep.subr.mxu0 0.0
  %1934 = vmatpush1.msra.mxu0 0.0
  %1935 = vmatprep.subr.mxu0 0.0
  %1936 = vmatpush1.msra.mxu0 0.0
  %1937 = vmatprep.subr.mxu0 0.0
  %1938 = vmatpush1.msra.mxu0 0.0
  %1939 = vmatprep.subr.mxu0 0.0
  %1940 = vmatpush1.msra.mxu0 0.0
  %1941 = vmatprep.subr.mxu0 0.0
  %1942 = vmatpush1.msra.mxu0 0.0
  %1943 = vmatprep.subr.mxu0 0.0
  %1944 = vmatpush1.msra.mxu0 0.0
  %1945 = vmatprep.subr.mxu0 0.0
  %1946 = vmatpush1.msra.mxu0 0.0
  %1947 = vmatprep.subr.mxu0 0.0
  %1948 = vmatpush1.msra.mxu0 0.0
  %1949 = vmatprep.subr.mxu0 0.0
  %1950 = vmatpush1.msra.mxu0 0.0
  %1951 = vmatprep.mubr.f32.mxu0 0.0
  %1952 = vmatmul.mubr.f32.gmra.mrb[0].mxu0 %v1885
  %v1953 = vpop.f32.mrb[0].mxu0
  %v1954 = vadd.f32 %v1880, %v1953
  %v1955 = vpop.f32.mrb[0].mxu0
  %1956 = vdwg.mxu0
  %v1957 = vmax.f32 %v1954, 0.0
  %v1958 = vlaneseq
  %v1959 = vshrl.u32 %v1958, 7
  %v1960 = vsub.s32 0, %v1959
  %v1961 = vrot.slane %v1876, %v1960
  %vm1962 = vcmask 130048
  %v1964 = vsel %vm1962, %v1957, 0
  %1966 = vmatprep.subr.mxu0 0.0
  %1967 = vmatpush1.msra.mxu0 %v1874
  %1968 = vmatprep.subr.mxu0 0.0
  %1969 = vmatpush1.msra.mxu0 %v1875
  %1970 = vmatprep.subr.mxu0 0.0
  %1971 = vmatpush1.msra.mxu0 0.0
  %1972 = vmatprep.subr.mxu0 0.0
  %1973 = vmatpush1.msra.mxu0 0.0
  %1974 = vmatprep.subr.mxu0 0.0
  %1975 = vmatpush1.msra.mxu0 0.0
  %1976 = vmatprep.subr.mxu0 0.0
  %1977 = vmatpush1.msra.mxu0 0.0
  %1978 = vmatprep.subr.mxu0 0.0
  %1979 = vmatpush1.msra.mxu0 0.0
  %1980 = vmatprep.subr.mxu0 0.0
  %1981 = vmatpush1.msra.mxu0 0.0
  %1982 = vmatprep.subr.mxu0 0.0
  %1983 = vmatpush1.msra.mxu0 0.0
  %1984 = vmatprep.subr.mxu0 0.0
  %1985 = vmatpush1.msra.mxu0 0.0
  %1986 = vmatprep.subr.mxu0 0.0
  %1987 = vmatpush1.msra.mxu0 0.0
  %1988 = vmatprep.subr.mxu0 0.0
  %1989 = vmatpush1.msra.mxu0 0.0
  %1990 = vmatprep.subr.mxu0 0.0
  %1991 = vmatpush1.msra.mxu0 0.0
  %1992 = vmatprep.subr.mxu0 0.0
  %1993 = vmatpush1.msra.mxu0 0.0
  %1994 = vmatprep.subr.mxu0 0.0
  %1995 = vmatpush1.msra.mxu0 0.0
  %1996 = vmatprep.subr.mxu0 0.0
  %1997 = vmatpush1.msra.mxu0 0.0
  %1998 = vmatprep.subr.mxu0 0.0
  %1999 = vmatpush1.msra.mxu0 0.0
  %2000 = vmatprep.subr.mxu0 0.0
  %2001 = vmatpush1.msra.mxu0 0.0
  %2002 = vmatprep.subr.mxu0 0.0
  %2003 = vmatpush1.msra.mxu0 0.0
  %2004 = vmatprep.subr.mxu0 0.0
  %2005 = vmatpush1.msra.mxu0 0.0
  %2006 = vmatprep.subr.mxu0 0.0
  %2007 = vmatpush1.msra.mxu0 0.0
  %2008 = vmatprep.subr.mxu0 0.0
  %2009 = vmatpush1.msra.mxu0 0.0
  %2010 = vmatprep.subr.mxu0 0.0
  %2011 = vmatpush1.msra.mxu0 0.0
  %2012 = vmatprep.subr.mxu0 0.0
  %2013 = vmatpush1.msra.mxu0 0.0
  %2014 = vmatprep.subr.mxu0 0.0
  %2015 = vmatpush1.msra.mxu0 0.0
  %2016 = vmatprep.subr.mxu0 0.0
  %2017 = vmatpush1.msra.mxu0 0.0
  %2018 = vmatprep.subr.mxu0 0.0
  %2019 = vmatpush1.msra.mxu0 0.0
  %2020 = vmatprep.subr.mxu0 0.0
  %2021 = vmatpush1.msra.mxu0 0.0
  %2022 = vmatprep.subr.mxu0 0.0
  %2023 = vmatpush1.msra.mxu0 0.0
  %2024 = vmatprep.subr.mxu0 0.0
  %2025 = vmatpush1.msra.mxu0 0.0
  %2026 = vmatprep.subr.mxu0 0.0
  %2027 = vmatpush1.msra.mxu0 0.0
  %2028 = vmatprep.subr.mxu0 0.0
  %2029 = vmatpush1.msra.mxu0 0.0
  %2030 = vmatprep.mubr.f32.mxu0 0.0
  %2031 = vmatmul.mubr.f32.gmra.mrb[0].mxu0 %v1964
  %v2032 = vpop.f32.mrb[0].mxu0
  %v2033 = vadd.f32 %v1961, %v2032
  %v2034 = vpop.f32.mrb[0].mxu0
  %2035 = vdwg.mxu0
  %v2036 = vxor.u32 %v2033, 2147483648
  %v2037 = vmul.f32 %v2036, 1.442695
  %v2038 = vpow.pop %v2037
  %v2039 = vadd.f32 %v2038, 1.0
  %v2040 = vrcp.pop %v2039
  %v2041 = vmul.f32 1.0, %v2040
  %vm2042 = vcmask 1024
  %2043 = vst.msk [vmem:[%s3] sm:$0x3] %vm2042, %v2041
  // Predicated region
  $region14: #{tpu_custom_call.1} parent=0 // pred_check
    _
  $region15: #{tpu_custom_call.1} parent=0 // pred_check_branch
    %2045 = sbr.rel (0) target = $region17
  $region16: #{tpu_custom_call.1} parent=0 // pred_region
    _
  $region17: #{tpu_custom_call.1} parent=0 // pred_fallthru
    _
  // Predicated region
  $region18: #{tpu_custom_call.1} parent=0 // pred_check
    _
  $region19: #{tpu_custom_call.1} parent=0 // pred_check_branch
    %2047 = sbr.rel (0) target = $region21
  $region20: #{tpu_custom_call.1} parent=0 // pred_region
    _
  $region21: #{tpu_custom_call.1} parent=0 // pred_fallthru
    _

</llo_original>
